<compile_context>
chip_gen: v5e
topology: v5e:2x2
jax: 0.10.0
libtpu: 0.0.40
codegen_flags: <defaults>
</compile_context>

<pallas_src>
import functools

import jax
import jax.numpy as jnp
from jax.experimental import pallas as pl
from jax.experimental.pallas import tpu as pltpu

_LANE = 128


def _conv_stats_kernel(x_ref, w_ref, o_ref, stats_ref, *, KH, KW, stride,
                       dilation, Ho, Wo, compute_dtype):
    # x_ref: (Hp, Wp, Cin)   w_ref: (KH*KW*Cin, Cp)
    # o_ref: (Ho*Wo, Cp)     stats_ref: (2, Cp) = [per-channel sum; sum of squares]
    Cin = x_ref.shape[-1]
    taps = []
    for kh in range(KH):
        for kw in range(KW):
            h0 = kh * dilation
            w0 = kw * dilation
            he = h0 + (Ho - 1) * stride + 1   # exact extent, never past Hp
            we = w0 + (Wo - 1) * stride + 1
            win = x_ref[h0:he, w0:we, :]      # slice the ref window only
            if stride > 1:
                win = win[::stride, ::stride, :]
            taps.append(win.reshape(Ho * Wo, Cin))
    # im2col slab: contraction depth KH*KW*Cin instead of KH*KW tiny matmuls.
    patches = jnp.concatenate(taps, axis=-1)                    # (Ho*Wo, KH*KW*Cin)
    acc = jnp.dot(patches.astype(compute_dtype),
                  w_ref[...].astype(compute_dtype),
                  preferred_element_type=jnp.float32)           # (Ho*Wo, Cp), f32
    o_ref[...] = acc.astype(o_ref.dtype)                        # lane-dense store
    stats_ref[...] = jnp.concatenate(
        [jnp.sum(acc, axis=0, keepdims=True),
         jnp.sum(acc * acc, axis=0, keepdims=True)], axis=0)


def _scale_bias_relu_kernel(y_ref, scale_ref, bias_ref, o_ref, *, use_relu):
    y = y_ref[...] * scale_ref[...] + bias_ref[...]
    if use_relu:
        y = jnp.maximum(y, 0.0)
    o_ref[...] = y.astype(o_ref.dtype)


def basic_conv(x_nchw, weight_oihw, gamma, beta, *, stride=1, padding=0,
               dilation=1, groups=1, relu=True, bn=True, eps=1e-5,
               compute_dtype=jnp.float32):
    """Forward pass of BasicConv. x_nchw: (N, Cin, H, W)."""
    if groups != 1:
        raise NotImplementedError("groups != 1 not supported")
        # TODO(synk): grouped conv needs per-group matmuls inside the kernel.

    N, Cin, H, W = x_nchw.shape
    Cout, _, KH, KW = weight_oihw.shape
    Ho = (H + 2 * padding - dilation * (KH - 1) - 1) // stride + 1
    Wo = (W + 2 * padding - dilation * (KW - 1) - 1) // stride + 1
    Cp = ((Cout + _LANE - 1) // _LANE) * _LANE   # lane-dense channel dim
    rows = Ho * Wo

    # ---- glue: layout + padding in plain JAX ----
    x_nhwc = jnp.transpose(x_nchw, (0, 2, 3, 1))
    x_pad = jnp.pad(x_nhwc, ((0, 0), (padding, padding),
                             (padding, padding), (0, 0)))
    Hp, Wp = x_pad.shape[1], x_pad.shape[2]
    # OIHW -> HWIO -> im2col weight matrix (KH*KW*Cin, Cout), padded to Cp lanes.
    w2 = jnp.transpose(weight_oihw, (2, 3, 1, 0)).reshape(KH * KW * Cin, Cout)
    w2 = jnp.pad(w2, ((0, 0), (0, Cp - Cout)))

    # VMEM budget: double-buffered blocks + headroom, capped well below v7x's 64 MiB.
    xb = Hp * Wp * Cin * 4
    wb = KH * KW * Cin * Cp * 4
    cb = rows * Cp * 4
    per_step = xb + wb + cb + 2 * Cp * 4
    vmem_limit = min(48 * 1024 * 1024, 16 * 1024 * 1024 + 4 * per_step)
    # TODO(synk): for large H*W, add output-row tiling (with halo) inside a batch step.

    kernel1 = functools.partial(_conv_stats_kernel, KH=KH, KW=KW, stride=stride,
                                dilation=dilation, Ho=Ho, Wo=Wo,
                                compute_dtype=compute_dtype)
    conv_out, stats = pl.pallas_call(
        kernel1,
        out_shape=(jax.ShapeDtypeStruct((N * rows, Cp), jnp.float32),
                   jax.ShapeDtypeStruct((N, 2, Cp), jnp.float32)),
        grid=(N,),
        in_specs=[
            pl.BlockSpec((None, Hp, Wp, Cin), lambda n: (n, 0, 0, 0)),
            pl.BlockSpec((KH * KW * Cin, Cp), lambda n: (0, 0)),
        ],
        out_specs=(
            pl.BlockSpec((rows, Cp), lambda n: (n, 0)),
            pl.BlockSpec((None, 2, Cp), lambda n: (n, 0, 0)),
        ),
        compiler_params=pltpu.CompilerParams(
            dimension_semantics=("parallel",),
            vmem_limit_bytes=vmem_limit),
        cost_estimate=pl.CostEstimate(
            flops=2 * N * rows * (KH * KW * Cin) * Cp,
            transcendentals=0,
            bytes_accessed=N * xb + wb + N * cb + N * 2 * Cp * 4),
    )(x_pad, w2)

    # ---- exact training-mode BatchNorm2d statistics (biased, over N*Ho*Wo) ----
    if bn:
        count = jnp.float32(N * rows)
        total = jnp.sum(stats, axis=0)                       # (2, Cp)
        mean = total[0] / count
        var = jnp.maximum(total[1] / count - mean * mean, 0.0)
        gpad = jnp.pad(gamma.astype(jnp.float32), (0, Cp - Cout))
        bpad = jnp.pad(beta.astype(jnp.float32), (0, Cp - Cout))
        scale = gpad * jax.lax.rsqrt(var + eps)              # folded gamma * inv-std
        bias = bpad - mean * scale
    else:
        scale = jnp.ones((Cp,), jnp.float32)
        bias = jnp.zeros((Cp,), jnp.float32)

    if bn or relu:
        kernel2 = functools.partial(_scale_bias_relu_kernel, use_relu=relu)
        out_padded = pl.pallas_call(
            kernel2,
            out_shape=jax.ShapeDtypeStruct((N * rows, Cp), jnp.float32),
            grid=(N,),
            in_specs=[
                pl.BlockSpec((rows, Cp), lambda n: (n, 0)),
                pl.BlockSpec((1, Cp), lambda n: (0, 0)),
                pl.BlockSpec((1, Cp), lambda n: (0, 0)),
            ],
            out_specs=pl.BlockSpec((rows, Cp), lambda n: (n, 0)),
            compiler_params=pltpu.CompilerParams(
                dimension_semantics=("parallel",),
                vmem_limit_bytes=vmem_limit),
            cost_estimate=pl.CostEstimate(
                flops=3 * N * rows * Cp, transcendentals=0,
                bytes_accessed=2 * N * rows * Cp * 4 + 2 * Cp * 4),
        )(conv_out, scale.reshape(1, Cp), bias.reshape(1, Cp))
    else:
        out_padded = conv_out

    out = out_padded[:, :Cout].reshape(N, Ho, Wo, Cout)
    return jnp.transpose(out, (0, 3, 1, 2))       # NHWC -> NCHW


def _reference(x_nchw, weight_oihw, gamma, beta, *, stride, padding, dilation,
               relu, bn, eps):
    y = jax.lax.conv_general_dilated(
        x_nchw, weight_oihw,
        window_strides=(stride, stride),
        padding=[(padding, padding), (padding, padding)],
        rhs_dilation=(dilation, dilation),
        dimension_numbers=("NCHW", "OIHW", "NCHW"))
    if bn:
        mean = jnp.mean(y, axis=(0, 2, 3), keepdims=True)
        var = jnp.mean((y - mean) ** 2, axis=(0, 2, 3), keepdims=True)
        y = (y - mean) * jax.lax.rsqrt(var + eps)
        y = y * gamma.reshape(1, -1, 1, 1) + beta.reshape(1, -1, 1, 1)
    if relu:
        y = jnp.maximum(y, 0.0)
    return y


if __name__ == "__main__":
    # BasicConv(in_planes=4, out_planes=8, kernel_size=3, stride=1, padding=1)
    N, Cin, H, W = 2, 4, 16, 16
    Cout, K = 8, 3
    stride, padding, dilation = 1, 1, 1

    key = jax.random.PRNGKey(0)
    kx, kw, kg, kb = jax.random.split(key, 4)
    x = jax.random.normal(kx, (N, Cin, H, W), jnp.float32)
    weight = jax.random.normal(kw, (Cout, Cin, K, K), jnp.float32) * 0.1
    gamma = 1.0 + 0.1 * jax.random.normal(kg, (Cout,), jnp.float32)
    beta = 0.1 * jax.random.normal(kb, (Cout,), jnp.float32)

    out = basic_conv(x, weight, gamma, beta, stride=stride, padding=padding,
                     dilation=dilation, relu=True, bn=True)
    out = jax.block_until_ready(out)

    ref = _reference(x, weight, gamma, beta, stride=stride, padding=padding,
                     dilation=dilation, relu=True, bn=True, eps=1e-5)
    assert out.shape == (N, Cout, H, W)
    err = jnp.max(jnp.abs(out - ref))
    assert jnp.allclose(out, ref, atol=2e-4, rtol=2e-4), f"max abs err {err}"
    print("KERNEL_OK")
</pallas_src>

<mosaic_0001>
module attributes {stable_mosaic.version = 11 : i64} {
  func.func @_conv_stats_kernel(%arg0: i32, %arg1: memref<1x18x18x4xf32, #tpu.memory_space<vmem>>, %arg2: memref<36x128xf32, #tpu.memory_space<vmem>>, %arg3: memref<256x128xf32, #tpu.memory_space<vmem>>, %arg4: memref<1x2x128xf32, #tpu.memory_space<vmem>>) attributes {dimension_semantics = [#tpu.dimension_semantics<parallel>], iteration_bounds = array<i64: 2>, scalar_prefetch = 0 : i64, scratch_operands = 0 : i64, tpu.core_type = #tpu.core_type<tc>, window_params = [{transform_indices = @transform_0, window_bounds = array<i64: 1, 18, 18, 4>}, {pipeline_mode = #tpu.pipeline_mode<synchronous>, transform_indices = @transform_1, window_bounds = array<i64: 36, 128>}, {transform_indices = @transform_2, window_bounds = array<i64: 256, 128>}, {transform_indices = @transform_3, window_bounds = array<i64: 1, 2, 128>}]} {
    %c0 = arith.constant 0 : index
    %c0_0 = arith.constant 0 : index
    %c0_1 = arith.constant 0 : index
    %c0_2 = arith.constant 0 : index
    %0 = vector.load %arg1[%c0, %c0_0, %c0_1, %c0_2] : memref<1x18x18x4xf32, #tpu.memory_space<vmem>>, vector<1x16x16x4xf32>
    %1 = vector.shape_cast %0 : vector<1x16x16x4xf32> to vector<16x16x4xf32>
    %2 = vector.shape_cast %1 : vector<16x16x4xf32> to vector<256x4xf32>
    %c0_3 = arith.constant 0 : index
    %c0_4 = arith.constant 0 : index
    %c1 = arith.constant 1 : index
    %c0_5 = arith.constant 0 : index
    %3 = vector.load %arg1[%c0_3, %c0_4, %c1, %c0_5] : memref<1x18x18x4xf32, #tpu.memory_space<vmem>>, vector<1x16x16x4xf32>
    %4 = vector.shape_cast %3 : vector<1x16x16x4xf32> to vector<16x16x4xf32>
    %5 = vector.shape_cast %4 : vector<16x16x4xf32> to vector<256x4xf32>
    %c0_6 = arith.constant 0 : index
    %c0_7 = arith.constant 0 : index
    %c2 = arith.constant 2 : index
    %c0_8 = arith.constant 0 : index
    %6 = vector.load %arg1[%c0_6, %c0_7, %c2, %c0_8] : memref<1x18x18x4xf32, #tpu.memory_space<vmem>>, vector<1x16x16x4xf32>
    %7 = vector.shape_cast %6 : vector<1x16x16x4xf32> to vector<16x16x4xf32>
    %8 = vector.shape_cast %7 : vector<16x16x4xf32> to vector<256x4xf32>
    %c0_9 = arith.constant 0 : index
    %c1_10 = arith.constant 1 : index
    %c0_11 = arith.constant 0 : index
    %c0_12 = arith.constant 0 : index
    %9 = vector.load %arg1[%c0_9, %c1_10, %c0_11, %c0_12] : memref<1x18x18x4xf32, #tpu.memory_space<vmem>>, vector<1x16x16x4xf32>
    %10 = vector.shape_cast %9 : vector<1x16x16x4xf32> to vector<16x16x4xf32>
    %11 = vector.shape_cast %10 : vector<16x16x4xf32> to vector<256x4xf32>
    %c0_13 = arith.constant 0 : index
    %c1_14 = arith.constant 1 : index
    %c1_15 = arith.constant 1 : index
    %c0_16 = arith.constant 0 : index
    %12 = vector.load %arg1[%c0_13, %c1_14, %c1_15, %c0_16] : memref<1x18x18x4xf32, #tpu.memory_space<vmem>>, vector<1x16x16x4xf32>
    %13 = vector.shape_cast %12 : vector<1x16x16x4xf32> to vector<16x16x4xf32>
    %14 = vector.shape_cast %13 : vector<16x16x4xf32> to vector<256x4xf32>
    %c0_17 = arith.constant 0 : index
    %c1_18 = arith.constant 1 : index
    %c2_19 = arith.constant 2 : index
    %c0_20 = arith.constant 0 : index
    %15 = vector.load %arg1[%c0_17, %c1_18, %c2_19, %c0_20] : memref<1x18x18x4xf32, #tpu.memory_space<vmem>>, vector<1x16x16x4xf32>
    %16 = vector.shape_cast %15 : vector<1x16x16x4xf32> to vector<16x16x4xf32>
    %17 = vector.shape_cast %16 : vector<16x16x4xf32> to vector<256x4xf32>
    %c0_21 = arith.constant 0 : index
    %c2_22 = arith.constant 2 : index
    %c0_23 = arith.constant 0 : index
    %c0_24 = arith.constant 0 : index
    %18 = vector.load %arg1[%c0_21, %c2_22, %c0_23, %c0_24] : memref<1x18x18x4xf32, #tpu.memory_space<vmem>>, vector<1x16x16x4xf32>
    %19 = vector.shape_cast %18 : vector<1x16x16x4xf32> to vector<16x16x4xf32>
    %20 = vector.shape_cast %19 : vector<16x16x4xf32> to vector<256x4xf32>
    %c0_25 = arith.constant 0 : index
    %c2_26 = arith.constant 2 : index
    %c1_27 = arith.constant 1 : index
    %c0_28 = arith.constant 0 : index
    %21 = vector.load %arg1[%c0_25, %c2_26, %c1_27, %c0_28] : memref<1x18x18x4xf32, #tpu.memory_space<vmem>>, vector<1x16x16x4xf32>
    %22 = vector.shape_cast %21 : vector<1x16x16x4xf32> to vector<16x16x4xf32>
    %23 = vector.shape_cast %22 : vector<16x16x4xf32> to vector<256x4xf32>
    %c0_29 = arith.constant 0 : index
    %c2_30 = arith.constant 2 : index
    %c2_31 = arith.constant 2 : index
    %c0_32 = arith.constant 0 : index
    %24 = vector.load %arg1[%c0_29, %c2_30, %c2_31, %c0_32] : memref<1x18x18x4xf32, #tpu.memory_space<vmem>>, vector<1x16x16x4xf32>
    %25 = vector.shape_cast %24 : vector<1x16x16x4xf32> to vector<16x16x4xf32>
    %26 = vector.shape_cast %25 : vector<16x16x4xf32> to vector<256x4xf32>
    %27 = tpu.concatenate %2, %5, %8, %11, %14, %17, %20, %23, %26 in 1 : vector<256x4xf32>, vector<256x4xf32>, vector<256x4xf32>, vector<256x4xf32>, vector<256x4xf32>, vector<256x4xf32>, vector<256x4xf32>, vector<256x4xf32>, vector<256x4xf32> -> vector<256x36xf32>
    %c0_33 = arith.constant 0 : index
    %c0_34 = arith.constant 0 : index
    %28 = vector.load %arg2[%c0_33, %c0_34] : memref<36x128xf32, #tpu.memory_space<vmem>>, vector<36x128xf32>
    %cst = arith.constant dense<0.000000e+00> : vector<256x128xf32>
    %29 = tpu.matmul %27, %28, %cst {dimension_numbers = #tpu.dot_dimension_numbers<[1], [0], [0], [1], [0, 0, 1, 1], [], []>} : vector<256x36xf32>, vector<36x128xf32>, vector<256x128xf32> -> vector<256x128xf32>
    %c0_35 = arith.constant 0 : index
    %c0_36 = arith.constant 0 : index
    %30 = vector.load %arg3[%c0_35, %c0_36] : memref<256x128xf32, #tpu.memory_space<vmem>>, vector<256x128xf32>
    tpu.vector_store %arg3[%c0_35, %c0_36], %29 {strides = array<i32>} : memref<256x128xf32, #tpu.memory_space<vmem>>, vector<256x128xf32>,
    %cst_37 = arith.constant dense<0.000000e+00> : vector<128xf32>
    %31 = vector.multi_reduction <add>, %29, %cst_37 [0] : vector<256x128xf32> to vector<128xf32>
    %32 = vector.shape_cast %31 : vector<128xf32> to vector<1x128xf32>
    %33 = arith.mulf %29, %29 : vector<256x128xf32>
    %cst_38 = arith.constant dense<0.000000e+00> : vector<128xf32>
    %34 = vector.multi_reduction <add>, %33, %cst_38 [0] : vector<256x128xf32> to vector<128xf32>
    %35 = vector.shape_cast %34 : vector<128xf32> to vector<1x128xf32>
    %36 = tpu.concatenate %32, %35 in 0 : vector<1x128xf32>, vector<1x128xf32> -> vector<2x128xf32>
    %c0_39 = arith.constant 0 : index
    %c0_40 = arith.constant 0 : index
    %c0_41 = arith.constant 0 : index
    %37 = vector.load %arg4[%c0_39, %c0_40, %c0_41] : memref<1x2x128xf32, #tpu.memory_space<vmem>>, vector<1x2x128xf32>
    %38 = vector.shape_cast %37 : vector<1x2x128xf32> to vector<2x128xf32>
    %39 = vector.shape_cast %36 : vector<2x128xf32> to vector<1x2x128xf32>
    tpu.vector_store %arg4[%c0_39, %c0_40, %c0_41], %39 {strides = array<i32>} : memref<1x2x128xf32, #tpu.memory_space<vmem>>, vector<1x2x128xf32>,
    return
  }
  func.func @transform_0(%arg0: i32) -> (i32, i32, i32, i32) {
    %c0_i32 = arith.constant 0 : i32
    %c0_i32_0 = arith.constant 0 : i32
    %c0_i32_1 = arith.constant 0 : i32
    %c0_i32_2 = arith.constant 0 : i32
    return %arg0, %c0_i32, %c0_i32_0, %c0_i32_1 : i32, i32, i32, i32
  }
  func.func @transform_1(%arg0: i32) -> (i32, i32) {
    %c0_i32 = arith.constant 0 : i32
    %c0_i32_0 = arith.constant 0 : i32
    %c0_i32_1 = arith.constant 0 : i32
    return %c0_i32, %c0_i32_0 : i32, i32
  }
  func.func @transform_2(%arg0: i32) -> (i32, i32) {
    %c0_i32 = arith.constant 0 : i32
    %c0_i32_0 = arith.constant 0 : i32
    return %arg0, %c0_i32 : i32, i32
  }
  func.func @transform_3(%arg0: i32) -> (i32, i32, i32) {
    %c0_i32 = arith.constant 0 : i32
    %c0_i32_0 = arith.constant 0 : i32
    %c0_i32_1 = arith.constant 0 : i32
    return %arg0, %c0_i32, %c0_i32_0 : i32, i32, i32
  }
}

</mosaic_0001>

<llo_original>
// kernel: tpu_custom_call.1
$region0: #{tpu_custom_call.1}
  #allocation0 [shape = 'u32[]', space=smem, size = 0x4, offset = 0x4, fixed_abs, tag = 'smem constant byte address 0x4 - core index']
  #allocation1 [shape = 'u32[72,128]{1,0:T(1,128)}', space=vmem, size = 0x9000, scoped, tag = 'internal scratch']
  %s0 = inlined_call_operand.vmem [shape: f32[2,18,18,4], index: 0, kind: input, shape index: {}]
  %s1 = inlined_call_operand.vmem [shape: f32[36,128], index: 1, kind: input, shape index: {}]
  %s2 = inlined_call_operand.hbm [shape: f32[512,128], index: 2, kind: output, shape index: {0}]
  %s3 = inlined_call_operand.hbm [shape: f32[2,2,128], index: 3, kind: output, shape index: {1}]
  %4 = xla_tuple %s2, %s3
  %s5 = sld [smem:[#allocation0]]
  $region49: #{tpu_custom_call.1} parent=0
    _
  %s7 = ssub.s32 1, %s5
  %s8 = scalar_select 0, %s7, %s5
  $region1: #{tpu_custom_call.1} parent=0
    #allocation2 [shape = 'u8[262144]{0}', space=vmem, size = 0x40000, scoped, tag = 'output window, operand 0']
    #allocation3 [shape = 's32[2]{0}', space=sflag, size = 0x8, scoped, tag = 'scoped memory for tpu_custom_call.1']
    #allocation4 [shape = 'u8[2048]{0}', space=vmem, size = 0x800, scoped, tag = 'output window, operand 1']
    #allocation5 [shape = 's32[2]{0}', space=sflag, size = 0x8, scoped, tag = 'scoped memory for tpu_custom_call.1']
    %9 = vsyncpa [#allocation3], 0
    %s10 = scalar_lea.sflag [#allocation3], 1
    %11 = vsyncpa %s10, 0
    %12 = vsyncpa [#allocation5], 0
    %s13 = scalar_lea.sflag [#allocation5], 1
    %14 = vsyncpa %s13, 0
    loop: start=0, step=1, limit=4
    $region2: #{tpu_custom_call.1} parent=1 // loop_pre_header
      _
    $region3: #{tpu_custom_call.1} parent=1 // loop_header
      %s16 = sphi 0, %s20
      %p17 = scmp.ge.s32.totalorder %s16, 4
      %s26 = sphi 0, %s28
      %s29 = sphi 0, %s26
      %s30 = sphi 0, %s29
      %s46 = sphi 0, %s30
      %s50 = sphi 0, %s50
      %s52 = sphi 0, %s50
      %s53 = sphi 0, %s52
      %s67 = sphi 0, %s53
      %s73 = sphi 0, %s75
      %s76 = sphi 0, %s73
      %s77 = sphi 0, %s76
      %s93 = sphi 0, %s77
      %s99 = sphi 0, %s101
      %s102 = sphi 0, %s99
      %s103 = sphi 0, %s102
      %s119 = sphi 0, %s103
    $region4: #{tpu_custom_call.1} parent=1 // loop_header_branch
      %19 = sbr.rel (%p17) target = $region8
    $region5: #{tpu_custom_call.1} parent=1 // loop_body
      %s21 = ssub.s32 %s16, 1
      %s22 = ssub.s32 %s16, 2
      %s23 = sadd.s32 %s16, 1
      %s24 = ssub.s32 %s16, %s23
      %p25 = scmp.eq.s32.totalorder %s24, 0
      %s27 = sadd.s32 %s26, 1
      %s28 = scalar_select %p25, %s26, %s27
      %p31 = pneg %p25
      %p32 = scmp.eq.s32.totalorder %s16, 1
      %p33 = por %p31, %p32
      %p34 = scmp.ne.s32.totalorder %s26, %s29
      %p35 = scmp.eq.s32.totalorder %s16, 0
      %p36 = por %p34, %p35
      %p37 = scmp.ne.s32.totalorder %s26, %s29
      %p38 = scmp.eq.s32.totalorder %s21, 1
      %p39 = por %p37, %p38
      %p40 = scmp.ne.s32.totalorder %s29, %s30
      %p41 = scmp.eq.s32.totalorder %s21, 0
      %p42 = por %p40, %p41
      %p43 = scmp.ne.s32.totalorder %s29, %s30
      %p44 = scmp.eq.s32.totalorder %s22, 1
      %p45 = por %p43, %p44
      %p47 = scmp.ne.s32.totalorder %s30, %s46
      %p48 = scmp.eq.s32.totalorder %s22, 0
      %p49 = por %p47, %p48
      %s51 = sadd.s32 %s50, 1
      %p54 = scmp.eq.s32.totalorder %s16, 1
      %p55 = scmp.ne.s32.totalorder %s50, %s52
      %p56 = scmp.eq.s32.totalorder %s16, 0
      %p57 = por %p55, %p56
      %p58 = scmp.ne.s32.totalorder %s50, %s52
      %p59 = scmp.eq.s32.totalorder %s21, 1
      %p60 = por %p58, %p59
      %p61 = scmp.ne.s32.totalorder %s52, %s53
      %p62 = scmp.eq.s32.totalorder %s21, 0
      %p63 = por %p61, %p62
      %p64 = scmp.ne.s32.totalorder %s52, %s53
      %p65 = scmp.eq.s32.totalorder %s22, 1
      %p66 = por %p64, %p65
      %p68 = scmp.ne.s32.totalorder %s53, %s67
      %p69 = scmp.eq.s32.totalorder %s22, 0
      %p70 = por %p68, %p69
      %s71 = ssub.s32 %s16, %s23
      %p72 = scmp.eq.s32.totalorder %s71, 0
      %s74 = sadd.s32 %s73, 1
      %s75 = scalar_select %p72, %s73, %s74
      %p78 = pneg %p72
      %p79 = scmp.eq.s32.totalorder %s16, 1
      %p80 = por %p78, %p79
      %p81 = scmp.ne.s32.totalorder %s73, %s76
      %p82 = scmp.eq.s32.totalorder %s16, 0
      %p83 = por %p81, %p82
      %p84 = scmp.ne.s32.totalorder %s73, %s76
      %p85 = scmp.eq.s32.totalorder %s21, 1
      %p86 = por %p84, %p85
      %p87 = scmp.ne.s32.totalorder %s76, %s77
      %p88 = scmp.eq.s32.totalorder %s21, 0
      %p89 = por %p87, %p88
      %p90 = scmp.ne.s32.totalorder %s76, %s77
      %p91 = scmp.eq.s32.totalorder %s22, 1
      %p92 = por %p90, %p91
      %p94 = scmp.ne.s32.totalorder %s77, %s93
      %p95 = scmp.eq.s32.totalorder %s22, 0
      %p96 = por %p94, %p95
      %s97 = ssub.s32 %s16, %s23
      %p98 = scmp.eq.s32.totalorder %s97, 0
      %s100 = sadd.s32 %s99, 1
      %s101 = scalar_select %p98, %s99, %s100
      %p104 = pneg %p98
      %p105 = scmp.eq.s32.totalorder %s16, 1
      %p106 = por %p104, %p105
      %p107 = scmp.ne.s32.totalorder %s99, %s102
      %p108 = scmp.eq.s32.totalorder %s16, 0
      %p109 = por %p107, %p108
      %p110 = scmp.ne.s32.totalorder %s99, %s102
      %p111 = scmp.eq.s32.totalorder %s21, 1
      %p112 = por %p110, %p111
      %p113 = scmp.ne.s32.totalorder %s102, %s103
      %p114 = scmp.eq.s32.totalorder %s21, 0
      %p115 = por %p113, %p114
      %p116 = scmp.ne.s32.totalorder %s102, %s103
      %p117 = scmp.eq.s32.totalorder %s22, 1
      %p118 = por %p116, %p117
      %p120 = scmp.ne.s32.totalorder %s103, %s119
      %p121 = scmp.eq.s32.totalorder %s22, 0
      %p122 = por %p120, %p121
      %p123 = scmp.le.s32.totalorder 1, %s16
      %p124 = scmp.lt.s32.totalorder %s16, 3
      %p125 = pnand %p123, %p124
      %p126 = pneg %p125
      // Predicated region
      $region9: #{tpu_custom_call.1} parent=5 // pred_check
        _
      $region10: #{tpu_custom_call.1} parent=5 // pred_check_branch
        %128 = sbr.rel (%p125) target = $region12
      $region11: #{tpu_custom_call.1} parent=5 // pred_region
        %s129 = ssub.s32 %s16, 1
        // Predicated region
        $region13: #{tpu_custom_call.1} parent=11 // pred_check
          %p130 = pneg %p63
        $region14: #{tpu_custom_call.1} parent=11 // pred_check_branch
          %132 = sbr.rel (%p130) target = $region16
        $region15: #{tpu_custom_call.1} parent=11 // pred_region
          _
        $region16: #{tpu_custom_call.1} parent=11 // pred_fallthru
          _
      $region12: #{tpu_custom_call.1} parent=5 // pred_fallthru
        _
      %p133 = scmp.lt.s32.totalorder %s16, 2
      // Predicated region
      $region17: #{tpu_custom_call.1} parent=5 // pred_check
        %p134 = pneg %p133
      $region18: #{tpu_custom_call.1} parent=5 // pred_check_branch
        %136 = sbr.rel (%p134) target = $region20
      $region19: #{tpu_custom_call.1} parent=5 // pred_region
        // Predicated region
        $region21: #{tpu_custom_call.1} parent=19 // pred_check
          %p137 = pneg %p36
        $region22: #{tpu_custom_call.1} parent=19 // pred_check_branch
          %139 = sbr.rel (%p137) target = $region24
        $region23: #{tpu_custom_call.1} parent=19 // pred_region
          %p140 = scmp.lt.s32.totalorder %s16, 1
          %s141 = scalar_select %p140, %s16, 1
          %s142 = smul.addr %s141, 54
          %s143 = smul.addr %s142, 8
          %s144 = scalar_lea.vmem %s0, %s143
        $region24: #{tpu_custom_call.1} parent=19 // pred_fallthru
          _
      $region20: #{tpu_custom_call.1} parent=5 // pred_fallthru
        _
      %p145 = scmp.le.s32.totalorder 1, %s16
      %p146 = scmp.lt.s32.totalorder %s16, 3
      %p147 = pnand %p145, %p146
      %p148 = pneg %p147
      // Predicated region
      $region25: #{tpu_custom_call.1} parent=5 // pred_check
        _
      $region26: #{tpu_custom_call.1} parent=5 // pred_check_branch
        %150 = sbr.rel (%p147) target = $region28
      $region27: #{tpu_custom_call.1} parent=5 // pred_region
        %s151 = ssub.s32 %s16, 1
        %p152 = scmp.lt.s32.totalorder %s21, 1
        %s153 = scalar_select %p152, %s21, 1
        %s154 = smul.addr %s153, 54
        %s155 = smul.addr %s154, 8
        %s156 = scalar_lea.vmem %s0, %s155
        %p157 = pneg %p42
        %p158 = pneg %p39
        %p159 = pneg %p63
        %p160 = pneg %p60
        %p161 = pneg %p89
        %p162 = pneg %p86
        %s163 = sand.u32 %s76, 1
        %s164 = scalar_lea.sflag [#allocation3], %s163
        %s165 = sand.u32 %s76, 1
        %s166 = smul.addr %s165, 256
        %s167 = scalar_lea.vmem [#allocation2], %s166
        %p168 = pneg %p115
        %p169 = pneg %p112
        %s170 = sand.u32 %s102, 1
        %s171 = scalar_lea.sflag [#allocation5], %s170
        %s172 = sand.u32 %s102, 1
        %s173 = smul.addr %s172, 2
        %s174 = scalar_lea.vmem [#allocation4], %s173
        %p175 = scmp.lt.s32.totalorder %s21, 1
        %s176 = scalar_select %p175, %s21, 1
        %s177 = smul.addr %s176, 54
        %s178 = smul.addr %s177, 8
        %s179 = scalar_lea.vmem %s0, %s178
        %s180 = smul.u32 32, %s21
        %v181 = vld [vmem:[%s179] sm:$0xff]
        %v182 = vld [vmem:[%s179 + $0x8] sm:$0xff]
        %v183 = vld [vmem:[%s179 + $0x18] sm:$0xff]
        %v184 = vld [vmem:[%s179 + $0x20] sm:$0xff]
        %v185 = vld [vmem:[%s179 + $0x30] sm:$0xff]
        %v186 = vld [vmem:[%s179 + $0x38] sm:$0xff]
        %v187 = vld [vmem:[%s179 + $0x48] sm:$0xff]
        %v188 = vld [vmem:[%s179 + $0x50] sm:$0xff]
        %v189 = vld [vmem:[%s179 + $0x60] sm:$0xff]
        %v190 = vld [vmem:[%s179 + $0x68] sm:$0xff]
        %v191 = vld [vmem:[%s179 + $0x78] sm:$0xff]
        %v192 = vld [vmem:[%s179 + $0x80] sm:$0xff]
        %v193 = vld [vmem:[%s179 + $0x90] sm:$0xff]
        %v194 = vld [vmem:[%s179 + $0x98] sm:$0xff]
        %v195 = vld [vmem:[%s179 + $0xa8] sm:$0xff]
        %v196 = vld [vmem:[%s179 + $0xb0] sm:$0xff]
        %v197 = vld [vmem:[%s179 + $0xc0] sm:$0xff]
        %v198 = vld [vmem:[%s179 + $0xc8] sm:$0xff]
        %v199 = vld [vmem:[%s179 + $0xd8] sm:$0xff]
        %v200 = vld [vmem:[%s179 + $0xe0] sm:$0xff]
        %v201 = vld [vmem:[%s179 + $0xf0] sm:$0xff]
        %v202 = vld [vmem:[%s179 + $0xf8] sm:$0xff]
        %v203 = vld [vmem:[%s179 + $0x108] sm:$0xff]
        %v204 = vld [vmem:[%s179 + $0x110] sm:$0xff]
        %v205 = vld [vmem:[%s179 + $0x120] sm:$0xff]
        %v206 = vld [vmem:[%s179 + $0x128] sm:$0xff]
        %v207 = vld [vmem:[%s179 + $0x138] sm:$0xff]
        %v208 = vld [vmem:[%s179 + $0x140] sm:$0xff]
        %v209 = vld [vmem:[%s179 + $0x150] sm:$0xff]
        %v210 = vld [vmem:[%s179 + $0x158] sm:$0xff]
        %v211 = vld [vmem:[%s179 + $0x168] sm:$0xff]
        %v212 = vld [vmem:[%s179 + $0x170] sm:$0xff]
        %v213 = vld [vmem:[%s179 + $0x1] sm:$0xff]
        %v214 = vld [vmem:[%s179 + $0x9] sm:$0xff]
        %v215 = vld [vmem:[%s179 + $0x19] sm:$0xff]
        %v216 = vld [vmem:[%s179 + $0x21] sm:$0xff]
        %v217 = vld [vmem:[%s179 + $0x31] sm:$0xff]
        %v218 = vld [vmem:[%s179 + $0x39] sm:$0xff]
        %v219 = vld [vmem:[%s179 + $0x49] sm:$0xff]
        %v220 = vld [vmem:[%s179 + $0x51] sm:$0xff]
        %v221 = vld [vmem:[%s179 + $0x61] sm:$0xff]
        %v222 = vld [vmem:[%s179 + $0x69] sm:$0xff]
        %v223 = vld [vmem:[%s179 + $0x79] sm:$0xff]
        %v224 = vld [vmem:[%s179 + $0x81] sm:$0xff]
        %v225 = vld [vmem:[%s179 + $0x91] sm:$0xff]
        %v226 = vld [vmem:[%s179 + $0x99] sm:$0xff]
        %v227 = vld [vmem:[%s179 + $0xa9] sm:$0xff]
        %v228 = vld [vmem:[%s179 + $0xb1] sm:$0xff]
        %v229 = vld [vmem:[%s179 + $0xc1] sm:$0xff]
        %v230 = vld [vmem:[%s179 + $0xc9] sm:$0xff]
        %v231 = vld [vmem:[%s179 + $0xd9] sm:$0xff]
        %v232 = vld [vmem:[%s179 + $0xe1] sm:$0xff]
        %v233 = vld [vmem:[%s179 + $0xf1] sm:$0xff]
        %v234 = vld [vmem:[%s179 + $0xf9] sm:$0xff]
        %v235 = vld [vmem:[%s179 + $0x109] sm:$0xff]
        %v236 = vld [vmem:[%s179 + $0x111] sm:$0xff]
        %v237 = vld [vmem:[%s179 + $0x121] sm:$0xff]
        %v238 = vld [vmem:[%s179 + $0x129] sm:$0xff]
        %v239 = vld [vmem:[%s179 + $0x139] sm:$0xff]
        %v240 = vld [vmem:[%s179 + $0x141] sm:$0xff]
        %v241 = vld [vmem:[%s179 + $0x151] sm:$0xff]
        %v242 = vld [vmem:[%s179 + $0x159] sm:$0xff]
        %v243 = vld [vmem:[%s179 + $0x169] sm:$0xff]
        %v244 = vld [vmem:[%s179 + $0x171] sm:$0xff]
        %v245 = vld [vmem:[%s179 + $0x2] sm:$0xff]
        %v246 = vld [vmem:[%s179 + $0xa] sm:$0xff]
        %v247 = vld [vmem:[%s179 + $0x1a] sm:$0xff]
        %v248 = vld [vmem:[%s179 + $0x22] sm:$0xff]
        %v249 = vld [vmem:[%s179 + $0x32] sm:$0xff]
        %v250 = vld [vmem:[%s179 + $0x3a] sm:$0xff]
        %v251 = vld [vmem:[%s179 + $0x4a] sm:$0xff]
        %v252 = vld [vmem:[%s179 + $0x52] sm:$0xff]
        %v253 = vld [vmem:[%s179 + $0x62] sm:$0xff]
        %v254 = vld [vmem:[%s179 + $0x6a] sm:$0xff]
        %v255 = vld [vmem:[%s179 + $0x7a] sm:$0xff]
        %v256 = vld [vmem:[%s179 + $0x82] sm:$0xff]
        %v257 = vld [vmem:[%s179 + $0x92] sm:$0xff]
        %v258 = vld [vmem:[%s179 + $0x9a] sm:$0xff]
        %v259 = vld [vmem:[%s179 + $0xaa] sm:$0xff]
        %v260 = vld [vmem:[%s179 + $0xb2] sm:$0xff]
        %v261 = vld [vmem:[%s179 + $0xc2] sm:$0xff]
        %v262 = vld [vmem:[%s179 + $0xca] sm:$0xff]
        %v263 = vld [vmem:[%s179 + $0xda] sm:$0xff]
        %v264 = vld [vmem:[%s179 + $0xe2] sm:$0xff]
        %v265 = vld [vmem:[%s179 + $0xf2] sm:$0xff]
        %v266 = vld [vmem:[%s179 + $0xfa] sm:$0xff]
        %v267 = vld [vmem:[%s179 + $0x10a] sm:$0xff]
        %v268 = vld [vmem:[%s179 + $0x112] sm:$0xff]
        %v269 = vld [vmem:[%s179 + $0x122] sm:$0xff]
        %v270 = vld [vmem:[%s179 + $0x12a] sm:$0xff]
        %v271 = vld [vmem:[%s179 + $0x13a] sm:$0xff]
        %v272 = vld [vmem:[%s179 + $0x142] sm:$0xff]
        %v273 = vld [vmem:[%s179 + $0x152] sm:$0xff]
        %v274 = vld [vmem:[%s179 + $0x15a] sm:$0xff]
        %v275 = vld [vmem:[%s179 + $0x16a] sm:$0xff]
        %v276 = vld [vmem:[%s179 + $0x172] sm:$0xff]
        %s277 = scalar_lea.vmem %s179, 24
        %v278 = vld [vmem:[%s277] sm:$0xff]
        %v279 = vld [vmem:[%s277 + $0x8] sm:$0xff]
        %v280 = vld [vmem:[%s277 + $0x18] sm:$0xff]
        %v281 = vld [vmem:[%s277 + $0x20] sm:$0xff]
        %v282 = vld [vmem:[%s277 + $0x30] sm:$0xff]
        %v283 = vld [vmem:[%s277 + $0x38] sm:$0xff]
        %v284 = vld [vmem:[%s277 + $0x48] sm:$0xff]
        %v285 = vld [vmem:[%s277 + $0x50] sm:$0xff]
        %v286 = vld [vmem:[%s277 + $0x60] sm:$0xff]
        %v287 = vld [vmem:[%s277 + $0x68] sm:$0xff]
        %v288 = vld [vmem:[%s277 + $0x78] sm:$0xff]
        %v289 = vld [vmem:[%s277 + $0x80] sm:$0xff]
        %v290 = vld [vmem:[%s277 + $0x90] sm:$0xff]
        %v291 = vld [vmem:[%s277 + $0x98] sm:$0xff]
        %v292 = vld [vmem:[%s277 + $0xa8] sm:$0xff]
        %v293 = vld [vmem:[%s277 + $0xb0] sm:$0xff]
        %v294 = vld [vmem:[%s277 + $0xc0] sm:$0xff]
        %v295 = vld [vmem:[%s277 + $0xc8] sm:$0xff]
        %v296 = vld [vmem:[%s277 + $0xd8] sm:$0xff]
        %v297 = vld [vmem:[%s277 + $0xe0] sm:$0xff]
        %v298 = vld [vmem:[%s277 + $0xf0] sm:$0xff]
        %v299 = vld [vmem:[%s277 + $0xf8] sm:$0xff]
        %v300 = vld [vmem:[%s277 + $0x108] sm:$0xff]
        %v301 = vld [vmem:[%s277 + $0x110] sm:$0xff]
        %v302 = vld [vmem:[%s277 + $0x120] sm:$0xff]
        %v303 = vld [vmem:[%s277 + $0x128] sm:$0xff]
        %v304 = vld [vmem:[%s277 + $0x138] sm:$0xff]
        %v305 = vld [vmem:[%s277 + $0x140] sm:$0xff]
        %v306 = vld [vmem:[%s277 + $0x150] sm:$0xff]
        %v307 = vld [vmem:[%s277 + $0x158] sm:$0xff]
        %v308 = vld [vmem:[%s277 + $0x168] sm:$0xff]
        %v309 = vld [vmem:[%s277 + $0x170] sm:$0xff]
        %v310 = vld [vmem:[%s277 + $0x1] sm:$0xff]
        %v311 = vld [vmem:[%s277 + $0x9] sm:$0xff]
        %v312 = vld [vmem:[%s277 + $0x19] sm:$0xff]
        %v313 = vld [vmem:[%s277 + $0x21] sm:$0xff]
        %v314 = vld [vmem:[%s277 + $0x31] sm:$0xff]
        %v315 = vld [vmem:[%s277 + $0x39] sm:$0xff]
        %v316 = vld [vmem:[%s277 + $0x49] sm:$0xff]
        %v317 = vld [vmem:[%s277 + $0x51] sm:$0xff]
        %v318 = vld [vmem:[%s277 + $0x61] sm:$0xff]
        %v319 = vld [vmem:[%s277 + $0x69] sm:$0xff]
        %v320 = vld [vmem:[%s277 + $0x79] sm:$0xff]
        %v321 = vld [vmem:[%s277 + $0x81] sm:$0xff]
        %v322 = vld [vmem:[%s277 + $0x91] sm:$0xff]
        %v323 = vld [vmem:[%s277 + $0x99] sm:$0xff]
        %v324 = vld [vmem:[%s277 + $0xa9] sm:$0xff]
        %v325 = vld [vmem:[%s277 + $0xb1] sm:$0xff]
        %v326 = vld [vmem:[%s277 + $0xc1] sm:$0xff]
        %v327 = vld [vmem:[%s277 + $0xc9] sm:$0xff]
        %v328 = vld [vmem:[%s277 + $0xd9] sm:$0xff]
        %v329 = vld [vmem:[%s277 + $0xe1] sm:$0xff]
        %v330 = vld [vmem:[%s277 + $0xf1] sm:$0xff]
        %v331 = vld [vmem:[%s277 + $0xf9] sm:$0xff]
        %v332 = vld [vmem:[%s277 + $0x109] sm:$0xff]
        %v333 = vld [vmem:[%s277 + $0x111] sm:$0xff]
        %v334 = vld [vmem:[%s277 + $0x121] sm:$0xff]
        %v335 = vld [vmem:[%s277 + $0x129] sm:$0xff]
        %v336 = vld [vmem:[%s277 + $0x139] sm:$0xff]
        %v337 = vld [vmem:[%s277 + $0x141] sm:$0xff]
        %v338 = vld [vmem:[%s277 + $0x151] sm:$0xff]
        %v339 = vld [vmem:[%s277 + $0x159] sm:$0xff]
        %v340 = vld [vmem:[%s277 + $0x169] sm:$0xff]
        %v341 = vld [vmem:[%s277 + $0x171] sm:$0xff]
        %v342 = vld [vmem:[%s277 + $0x2] sm:$0xff]
        %v343 = vld [vmem:[%s277 + $0xa] sm:$0xff]
        %v344 = vld [vmem:[%s277 + $0x1a] sm:$0xff]
        %v345 = vld [vmem:[%s277 + $0x22] sm:$0xff]
        %v346 = vld [vmem:[%s277 + $0x32] sm:$0xff]
        %v347 = vld [vmem:[%s277 + $0x3a] sm:$0xff]
        %v348 = vld [vmem:[%s277 + $0x4a] sm:$0xff]
        %v349 = vld [vmem:[%s277 + $0x52] sm:$0xff]
        %v350 = vld [vmem:[%s277 + $0x62] sm:$0xff]
        %v351 = vld [vmem:[%s277 + $0x6a] sm:$0xff]
        %v352 = vld [vmem:[%s277 + $0x7a] sm:$0xff]
        %v353 = vld [vmem:[%s277 + $0x82] sm:$0xff]
        %v354 = vld [vmem:[%s277 + $0x92] sm:$0xff]
        %v355 = vld [vmem:[%s277 + $0x9a] sm:$0xff]
        %v356 = vld [vmem:[%s277 + $0xaa] sm:$0xff]
        %v357 = vld [vmem:[%s277 + $0xb2] sm:$0xff]
        %v358 = vld [vmem:[%s277 + $0xc2] sm:$0xff]
        %v359 = vld [vmem:[%s277 + $0xca] sm:$0xff]
        %v360 = vld [vmem:[%s277 + $0xda] sm:$0xff]
        %v361 = vld [vmem:[%s277 + $0xe2] sm:$0xff]
        %v362 = vld [vmem:[%s277 + $0xf2] sm:$0xff]
        %v363 = vld [vmem:[%s277 + $0xfa] sm:$0xff]
        %v364 = vld [vmem:[%s277 + $0x10a] sm:$0xff]
        %v365 = vld [vmem:[%s277 + $0x112] sm:$0xff]
        %v366 = vld [vmem:[%s277 + $0x122] sm:$0xff]
        %v367 = vld [vmem:[%s277 + $0x12a] sm:$0xff]
        %v368 = vld [vmem:[%s277 + $0x13a] sm:$0xff]
        %v369 = vld [vmem:[%s277 + $0x142] sm:$0xff]
        %v370 = vld [vmem:[%s277 + $0x152] sm:$0xff]
        %v371 = vld [vmem:[%s277 + $0x15a] sm:$0xff]
        %v372 = vld [vmem:[%s277 + $0x16a] sm:$0xff]
        %v373 = vld [vmem:[%s277 + $0x172] sm:$0xff]
        %s374 = scalar_lea.vmem %s179, 48
        %v375 = vld [vmem:[%s374] sm:$0xff]
        %v376 = vld [vmem:[%s374 + $0x8] sm:$0xff]
        %v377 = vld [vmem:[%s374 + $0x18] sm:$0xff]
        %v378 = vld [vmem:[%s374 + $0x20] sm:$0xff]
        %v379 = vld [vmem:[%s374 + $0x30] sm:$0xff]
        %v380 = vld [vmem:[%s374 + $0x38] sm:$0xff]
        %v381 = vld [vmem:[%s374 + $0x48] sm:$0xff]
        %v382 = vld [vmem:[%s374 + $0x50] sm:$0xff]
        %v383 = vld [vmem:[%s374 + $0x60] sm:$0xff]
        %v384 = vld [vmem:[%s374 + $0x68] sm:$0xff]
        %v385 = vld [vmem:[%s374 + $0x78] sm:$0xff]
        %v386 = vld [vmem:[%s374 + $0x80] sm:$0xff]
        %v387 = vld [vmem:[%s374 + $0x90] sm:$0xff]
        %v388 = vld [vmem:[%s374 + $0x98] sm:$0xff]
        %v389 = vld [vmem:[%s374 + $0xa8] sm:$0xff]
        %v390 = vld [vmem:[%s374 + $0xb0] sm:$0xff]
        %v391 = vld [vmem:[%s374 + $0xc0] sm:$0xff]
        %v392 = vld [vmem:[%s374 + $0xc8] sm:$0xff]
        %v393 = vld [vmem:[%s374 + $0xd8] sm:$0xff]
        %v394 = vld [vmem:[%s374 + $0xe0] sm:$0xff]
        %v395 = vld [vmem:[%s374 + $0xf0] sm:$0xff]
        %v396 = vld [vmem:[%s374 + $0xf8] sm:$0xff]
        %v397 = vld [vmem:[%s374 + $0x108] sm:$0xff]
        %v398 = vld [vmem:[%s374 + $0x110] sm:$0xff]
        %v399 = vld [vmem:[%s374 + $0x120] sm:$0xff]
        %v400 = vld [vmem:[%s374 + $0x128] sm:$0xff]
        %v401 = vld [vmem:[%s374 + $0x138] sm:$0xff]
        %v402 = vld [vmem:[%s374 + $0x140] sm:$0xff]
        %v403 = vld [vmem:[%s374 + $0x150] sm:$0xff]
        %v404 = vld [vmem:[%s374 + $0x158] sm:$0xff]
        %v405 = vld [vmem:[%s374 + $0x168] sm:$0xff]
        %v406 = vld [vmem:[%s374 + $0x170] sm:$0xff]
        %v407 = vld [vmem:[%s374 + $0x1] sm:$0xff]
        %v408 = vld [vmem:[%s374 + $0x9] sm:$0xff]
        %v409 = vld [vmem:[%s374 + $0x19] sm:$0xff]
        %v410 = vld [vmem:[%s374 + $0x21] sm:$0xff]
        %v411 = vld [vmem:[%s374 + $0x31] sm:$0xff]
        %v412 = vld [vmem:[%s374 + $0x39] sm:$0xff]
        %v413 = vld [vmem:[%s374 + $0x49] sm:$0xff]
        %v414 = vld [vmem:[%s374 + $0x51] sm:$0xff]
        %v415 = vld [vmem:[%s374 + $0x61] sm:$0xff]
        %v416 = vld [vmem:[%s374 + $0x69] sm:$0xff]
        %v417 = vld [vmem:[%s374 + $0x79] sm:$0xff]
        %v418 = vld [vmem:[%s374 + $0x81] sm:$0xff]
        %v419 = vld [vmem:[%s374 + $0x91] sm:$0xff]
        %v420 = vld [vmem:[%s374 + $0x99] sm:$0xff]
        %v421 = vld [vmem:[%s374 + $0xa9] sm:$0xff]
        %v422 = vld [vmem:[%s374 + $0xb1] sm:$0xff]
        %v423 = vld [vmem:[%s374 + $0xc1] sm:$0xff]
        %v424 = vld [vmem:[%s374 + $0xc9] sm:$0xff]
        %v425 = vld [vmem:[%s374 + $0xd9] sm:$0xff]
        %v426 = vld [vmem:[%s374 + $0xe1] sm:$0xff]
        %v427 = vld [vmem:[%s374 + $0xf1] sm:$0xff]
        %v428 = vld [vmem:[%s374 + $0xf9] sm:$0xff]
        %v429 = vld [vmem:[%s374 + $0x109] sm:$0xff]
        %v430 = vld [vmem:[%s374 + $0x111] sm:$0xff]
        %v431 = vld [vmem:[%s374 + $0x121] sm:$0xff]
        %v432 = vld [vmem:[%s374 + $0x129] sm:$0xff]
        %v433 = vld [vmem:[%s374 + $0x139] sm:$0xff]
        %v434 = vld [vmem:[%s374 + $0x141] sm:$0xff]
        %v435 = vld [vmem:[%s374 + $0x151] sm:$0xff]
        %v436 = vld [vmem:[%s374 + $0x159] sm:$0xff]
        %v437 = vld [vmem:[%s374 + $0x169] sm:$0xff]
        %v438 = vld [vmem:[%s374 + $0x171] sm:$0xff]
        %v439 = vld [vmem:[%s374 + $0x2] sm:$0xff]
        %v440 = vld [vmem:[%s374 + $0xa] sm:$0xff]
        %v441 = vld [vmem:[%s374 + $0x1a] sm:$0xff]
        %v442 = vld [vmem:[%s374 + $0x22] sm:$0xff]
        %v443 = vld [vmem:[%s374 + $0x32] sm:$0xff]
        %v444 = vld [vmem:[%s374 + $0x3a] sm:$0xff]
        %v445 = vld [vmem:[%s374 + $0x4a] sm:$0xff]
        %v446 = vld [vmem:[%s374 + $0x52] sm:$0xff]
        %v447 = vld [vmem:[%s374 + $0x62] sm:$0xff]
        %v448 = vld [vmem:[%s374 + $0x6a] sm:$0xff]
        %v449 = vld [vmem:[%s374 + $0x7a] sm:$0xff]
        %v450 = vld [vmem:[%s374 + $0x82] sm:$0xff]
        %v451 = vld [vmem:[%s374 + $0x92] sm:$0xff]
        %v452 = vld [vmem:[%s374 + $0x9a] sm:$0xff]
        %v453 = vld [vmem:[%s374 + $0xaa] sm:$0xff]
        %v454 = vld [vmem:[%s374 + $0xb2] sm:$0xff]
        %v455 = vld [vmem:[%s374 + $0xc2] sm:$0xff]
        %v456 = vld [vmem:[%s374 + $0xca] sm:$0xff]
        %v457 = vld [vmem:[%s374 + $0xda] sm:$0xff]
        %v458 = vld [vmem:[%s374 + $0xe2] sm:$0xff]
        %v459 = vld [vmem:[%s374 + $0xf2] sm:$0xff]
        %v460 = vld [vmem:[%s374 + $0xfa] sm:$0xff]
        %v461 = vld [vmem:[%s374 + $0x10a] sm:$0xff]
        %v462 = vld [vmem:[%s374 + $0x112] sm:$0xff]
        %v463 = vld [vmem:[%s374 + $0x122] sm:$0xff]
        %v464 = vld [vmem:[%s374 + $0x12a] sm:$0xff]
        %v465 = vld [vmem:[%s374 + $0x13a] sm:$0xff]
        %v466 = vld [vmem:[%s374 + $0x142] sm:$0xff]
        %v467 = vld [vmem:[%s374 + $0x152] sm:$0xff]
        %v468 = vld [vmem:[%s374 + $0x15a] sm:$0xff]
        %v469 = vld [vmem:[%s374 + $0x16a] sm:$0xff]
        %v470 = vld [vmem:[%s374 + $0x172] sm:$0xff]
        %503 = vrot.lane.b32.xlu0 %v213, 4
        %v504 = vpop.permute.xlu0 %503
        %505 = vrot.lane.b32.xlu0 %v214, 4
        %v506 = vpop.permute.xlu0 %505
        %507 = vrot.lane.b32.xlu0 %v215, 4
        %v508 = vpop.permute.xlu0 %507
        %509 = vrot.lane.b32.xlu0 %v216, 4
        %v510 = vpop.permute.xlu0 %509
        %511 = vrot.lane.b32.xlu0 %v217, 4
        %v512 = vpop.permute.xlu0 %511
        %513 = vrot.lane.b32.xlu0 %v218, 4
        %v514 = vpop.permute.xlu0 %513
        %515 = vrot.lane.b32.xlu0 %v219, 4
        %v516 = vpop.permute.xlu0 %515
        %517 = vrot.lane.b32.xlu0 %v220, 4
        %v518 = vpop.permute.xlu0 %517
        %519 = vrot.lane.b32.xlu0 %v221, 4
        %v520 = vpop.permute.xlu0 %519
        %521 = vrot.lane.b32.xlu0 %v222, 4
        %v522 = vpop.permute.xlu0 %521
        %523 = vrot.lane.b32.xlu0 %v223, 4
        %v524 = vpop.permute.xlu0 %523
        %525 = vrot.lane.b32.xlu0 %v224, 4
        %v526 = vpop.permute.xlu0 %525
        %527 = vrot.lane.b32.xlu0 %v225, 4
        %v528 = vpop.permute.xlu0 %527
        %529 = vrot.lane.b32.xlu0 %v226, 4
        %v530 = vpop.permute.xlu0 %529
        %531 = vrot.lane.b32.xlu0 %v227, 4
        %v532 = vpop.permute.xlu0 %531
        %533 = vrot.lane.b32.xlu0 %v228, 4
        %v534 = vpop.permute.xlu0 %533
        %535 = vrot.lane.b32.xlu0 %v229, 4
        %v536 = vpop.permute.xlu0 %535
        %537 = vrot.lane.b32.xlu0 %v230, 4
        %v538 = vpop.permute.xlu0 %537
        %539 = vrot.lane.b32.xlu0 %v231, 4
        %v540 = vpop.permute.xlu0 %539
        %541 = vrot.lane.b32.xlu0 %v232, 4
        %v542 = vpop.permute.xlu0 %541
        %543 = vrot.lane.b32.xlu0 %v233, 4
        %v544 = vpop.permute.xlu0 %543
        %545 = vrot.lane.b32.xlu0 %v234, 4
        %v546 = vpop.permute.xlu0 %545
        %547 = vrot.lane.b32.xlu0 %v235, 4
        %v548 = vpop.permute.xlu0 %547
        %549 = vrot.lane.b32.xlu0 %v236, 4
        %v550 = vpop.permute.xlu0 %549
        %551 = vrot.lane.b32.xlu0 %v237, 4
        %v552 = vpop.permute.xlu0 %551
        %553 = vrot.lane.b32.xlu0 %v238, 4
        %v554 = vpop.permute.xlu0 %553
        %555 = vrot.lane.b32.xlu0 %v239, 4
        %v556 = vpop.permute.xlu0 %555
        %557 = vrot.lane.b32.xlu0 %v240, 4
        %v558 = vpop.permute.xlu0 %557
        %559 = vrot.lane.b32.xlu0 %v241, 4
        %v560 = vpop.permute.xlu0 %559
        %561 = vrot.lane.b32.xlu0 %v242, 4
        %v562 = vpop.permute.xlu0 %561
        %563 = vrot.lane.b32.xlu0 %v243, 4
        %v564 = vpop.permute.xlu0 %563
        %565 = vrot.lane.b32.xlu0 %v244, 4
        %v566 = vpop.permute.xlu0 %565
        %631 = vrot.lane.b32.xlu0 %v245, 8
        %v632 = vpop.permute.xlu0 %631
        %633 = vrot.lane.b32.xlu0 %v246, 8
        %v634 = vpop.permute.xlu0 %633
        %635 = vrot.lane.b32.xlu0 %v247, 8
        %v636 = vpop.permute.xlu0 %635
        %637 = vrot.lane.b32.xlu0 %v248, 8
        %v638 = vpop.permute.xlu0 %637
        %639 = vrot.lane.b32.xlu0 %v249, 8
        %v640 = vpop.permute.xlu0 %639
        %641 = vrot.lane.b32.xlu0 %v250, 8
        %v642 = vpop.permute.xlu0 %641
        %643 = vrot.lane.b32.xlu0 %v251, 8
        %v644 = vpop.permute.xlu0 %643
        %645 = vrot.lane.b32.xlu0 %v252, 8
        %v646 = vpop.permute.xlu0 %645
        %647 = vrot.lane.b32.xlu0 %v253, 8
        %v648 = vpop.permute.xlu0 %647
        %649 = vrot.lane.b32.xlu0 %v254, 8
        %v650 = vpop.permute.xlu0 %649
        %651 = vrot.lane.b32.xlu0 %v255, 8
        %v652 = vpop.permute.xlu0 %651
        %653 = vrot.lane.b32.xlu0 %v256, 8
        %v654 = vpop.permute.xlu0 %653
        %655 = vrot.lane.b32.xlu0 %v257, 8
        %v656 = vpop.permute.xlu0 %655
        %657 = vrot.lane.b32.xlu0 %v258, 8
        %v658 = vpop.permute.xlu0 %657
        %659 = vrot.lane.b32.xlu0 %v259, 8
        %v660 = vpop.permute.xlu0 %659
        %661 = vrot.lane.b32.xlu0 %v260, 8
        %v662 = vpop.permute.xlu0 %661
        %663 = vrot.lane.b32.xlu0 %v261, 8
        %v664 = vpop.permute.xlu0 %663
        %665 = vrot.lane.b32.xlu0 %v262, 8
        %v666 = vpop.permute.xlu0 %665
        %667 = vrot.lane.b32.xlu0 %v263, 8
        %v668 = vpop.permute.xlu0 %667
        %669 = vrot.lane.b32.xlu0 %v264, 8
        %v670 = vpop.permute.xlu0 %669
        %671 = vrot.lane.b32.xlu0 %v265, 8
        %v672 = vpop.permute.xlu0 %671
        %673 = vrot.lane.b32.xlu0 %v266, 8
        %v674 = vpop.permute.xlu0 %673
        %675 = vrot.lane.b32.xlu0 %v267, 8
        %v676 = vpop.permute.xlu0 %675
        %677 = vrot.lane.b32.xlu0 %v268, 8
        %v678 = vpop.permute.xlu0 %677
        %679 = vrot.lane.b32.xlu0 %v269, 8
        %v680 = vpop.permute.xlu0 %679
        %681 = vrot.lane.b32.xlu0 %v270, 8
        %v682 = vpop.permute.xlu0 %681
        %683 = vrot.lane.b32.xlu0 %v271, 8
        %v684 = vpop.permute.xlu0 %683
        %685 = vrot.lane.b32.xlu0 %v272, 8
        %v686 = vpop.permute.xlu0 %685
        %687 = vrot.lane.b32.xlu0 %v273, 8
        %v688 = vpop.permute.xlu0 %687
        %689 = vrot.lane.b32.xlu0 %v274, 8
        %v690 = vpop.permute.xlu0 %689
        %691 = vrot.lane.b32.xlu0 %v275, 8
        %v692 = vpop.permute.xlu0 %691
        %693 = vrot.lane.b32.xlu0 %v276, 8
        %v694 = vpop.permute.xlu0 %693
        %759 = vrot.lane.b32.xlu0 %v278, 12
        %v760 = vpop.permute.xlu0 %759
        %761 = vrot.lane.b32.xlu0 %v279, 12
        %v762 = vpop.permute.xlu0 %761
        %763 = vrot.lane.b32.xlu0 %v280, 12
        %v764 = vpop.permute.xlu0 %763
        %765 = vrot.lane.b32.xlu0 %v281, 12
        %v766 = vpop.permute.xlu0 %765
        %767 = vrot.lane.b32.xlu0 %v282, 12
        %v768 = vpop.permute.xlu0 %767
        %769 = vrot.lane.b32.xlu0 %v283, 12
        %v770 = vpop.permute.xlu0 %769
        %771 = vrot.lane.b32.xlu0 %v284, 12
        %v772 = vpop.permute.xlu0 %771
        %773 = vrot.lane.b32.xlu0 %v285, 12
        %v774 = vpop.permute.xlu0 %773
        %775 = vrot.lane.b32.xlu0 %v286, 12
        %v776 = vpop.permute.xlu0 %775
        %777 = vrot.lane.b32.xlu0 %v287, 12
        %v778 = vpop.permute.xlu0 %777
        %779 = vrot.lane.b32.xlu0 %v288, 12
        %v780 = vpop.permute.xlu0 %779
        %781 = vrot.lane.b32.xlu0 %v289, 12
        %v782 = vpop.permute.xlu0 %781
        %783 = vrot.lane.b32.xlu0 %v290, 12
        %v784 = vpop.permute.xlu0 %783
        %785 = vrot.lane.b32.xlu0 %v291, 12
        %v786 = vpop.permute.xlu0 %785
        %787 = vrot.lane.b32.xlu0 %v292, 12
        %v788 = vpop.permute.xlu0 %787
        %789 = vrot.lane.b32.xlu0 %v293, 12
        %v790 = vpop.permute.xlu0 %789
        %791 = vrot.lane.b32.xlu0 %v294, 12
        %v792 = vpop.permute.xlu0 %791
        %793 = vrot.lane.b32.xlu0 %v295, 12
        %v794 = vpop.permute.xlu0 %793
        %795 = vrot.lane.b32.xlu0 %v296, 12
        %v796 = vpop.permute.xlu0 %795
        %797 = vrot.lane.b32.xlu0 %v297, 12
        %v798 = vpop.permute.xlu0 %797
        %799 = vrot.lane.b32.xlu0 %v298, 12
        %v800 = vpop.permute.xlu0 %799
        %801 = vrot.lane.b32.xlu0 %v299, 12
        %v802 = vpop.permute.xlu0 %801
        %803 = vrot.lane.b32.xlu0 %v300, 12
        %v804 = vpop.permute.xlu0 %803
        %805 = vrot.lane.b32.xlu0 %v301, 12
        %v806 = vpop.permute.xlu0 %805
        %807 = vrot.lane.b32.xlu0 %v302, 12
        %v808 = vpop.permute.xlu0 %807
        %809 = vrot.lane.b32.xlu0 %v303, 12
        %v810 = vpop.permute.xlu0 %809
        %811 = vrot.lane.b32.xlu0 %v304, 12
        %v812 = vpop.permute.xlu0 %811
        %813 = vrot.lane.b32.xlu0 %v305, 12
        %v814 = vpop.permute.xlu0 %813
        %815 = vrot.lane.b32.xlu0 %v306, 12
        %v816 = vpop.permute.xlu0 %815
        %817 = vrot.lane.b32.xlu0 %v307, 12
        %v818 = vpop.permute.xlu0 %817
        %819 = vrot.lane.b32.xlu0 %v308, 12
        %v820 = vpop.permute.xlu0 %819
        %821 = vrot.lane.b32.xlu0 %v309, 12
        %v822 = vpop.permute.xlu0 %821
        %887 = vrot.lane.b32.xlu0 %v310, 16
        %v888 = vpop.permute.xlu0 %887
        %889 = vrot.lane.b32.xlu0 %v311, 16
        %v890 = vpop.permute.xlu0 %889
        %891 = vrot.lane.b32.xlu0 %v312, 16
        %v892 = vpop.permute.xlu0 %891
        %893 = vrot.lane.b32.xlu0 %v313, 16
        %v894 = vpop.permute.xlu0 %893
        %895 = vrot.lane.b32.xlu0 %v314, 16
        %v896 = vpop.permute.xlu0 %895
        %897 = vrot.lane.b32.xlu0 %v315, 16
        %v898 = vpop.permute.xlu0 %897
        %899 = vrot.lane.b32.xlu0 %v316, 16
        %v900 = vpop.permute.xlu0 %899
        %901 = vrot.lane.b32.xlu0 %v317, 16
        %v902 = vpop.permute.xlu0 %901
        %903 = vrot.lane.b32.xlu0 %v318, 16
        %v904 = vpop.permute.xlu0 %903
        %905 = vrot.lane.b32.xlu0 %v319, 16
        %v906 = vpop.permute.xlu0 %905
        %907 = vrot.lane.b32.xlu0 %v320, 16
        %v908 = vpop.permute.xlu0 %907
        %909 = vrot.lane.b32.xlu0 %v321, 16
        %v910 = vpop.permute.xlu0 %909
        %911 = vrot.lane.b32.xlu0 %v322, 16
        %v912 = vpop.permute.xlu0 %911
        %913 = vrot.lane.b32.xlu0 %v323, 16
        %v914 = vpop.permute.xlu0 %913
        %915 = vrot.lane.b32.xlu0 %v324, 16
        %v916 = vpop.permute.xlu0 %915
        %917 = vrot.lane.b32.xlu0 %v325, 16
        %v918 = vpop.permute.xlu0 %917
        %919 = vrot.lane.b32.xlu0 %v326, 16
        %v920 = vpop.permute.xlu0 %919
        %921 = vrot.lane.b32.xlu0 %v327, 16
        %v922 = vpop.permute.xlu0 %921
        %923 = vrot.lane.b32.xlu0 %v328, 16
        %v924 = vpop.permute.xlu0 %923
        %925 = vrot.lane.b32.xlu0 %v329, 16
        %v926 = vpop.permute.xlu0 %925
        %927 = vrot.lane.b32.xlu0 %v330, 16
        %v928 = vpop.permute.xlu0 %927
        %929 = vrot.lane.b32.xlu0 %v331, 16
        %v930 = vpop.permute.xlu0 %929
        %931 = vrot.lane.b32.xlu0 %v332, 16
        %v932 = vpop.permute.xlu0 %931
        %933 = vrot.lane.b32.xlu0 %v333, 16
        %v934 = vpop.permute.xlu0 %933
        %935 = vrot.lane.b32.xlu0 %v334, 16
        %v936 = vpop.permute.xlu0 %935
        %937 = vrot.lane.b32.xlu0 %v335, 16
        %v938 = vpop.permute.xlu0 %937
        %939 = vrot.lane.b32.xlu0 %v336, 16
        %v940 = vpop.permute.xlu0 %939
        %941 = vrot.lane.b32.xlu0 %v337, 16
        %v942 = vpop.permute.xlu0 %941
        %943 = vrot.lane.b32.xlu0 %v338, 16
        %v944 = vpop.permute.xlu0 %943
        %945 = vrot.lane.b32.xlu0 %v339, 16
        %v946 = vpop.permute.xlu0 %945
        %947 = vrot.lane.b32.xlu0 %v340, 16
        %v948 = vpop.permute.xlu0 %947
        %949 = vrot.lane.b32.xlu0 %v341, 16
        %v950 = vpop.permute.xlu0 %949
        %1015 = vrot.lane.b32.xlu0 %v342, 20
        %v1016 = vpop.permute.xlu0 %1015
        %1017 = vrot.lane.b32.xlu0 %v343, 20
        %v1018 = vpop.permute.xlu0 %1017
        %1019 = vrot.lane.b32.xlu0 %v344, 20
        %v1020 = vpop.permute.xlu0 %1019
        %1021 = vrot.lane.b32.xlu0 %v345, 20
        %v1022 = vpop.permute.xlu0 %1021
        %1023 = vrot.lane.b32.xlu0 %v346, 20
        %v1024 = vpop.permute.xlu0 %1023
        %1025 = vrot.lane.b32.xlu0 %v347, 20
        %v1026 = vpop.permute.xlu0 %1025
        %1027 = vrot.lane.b32.xlu0 %v348, 20
        %v1028 = vpop.permute.xlu0 %1027
        %1029 = vrot.lane.b32.xlu0 %v349, 20
        %v1030 = vpop.permute.xlu0 %1029
        %1031 = vrot.lane.b32.xlu0 %v350, 20
        %v1032 = vpop.permute.xlu0 %1031
        %1033 = vrot.lane.b32.xlu0 %v351, 20
        %v1034 = vpop.permute.xlu0 %1033
        %1035 = vrot.lane.b32.xlu0 %v352, 20
        %v1036 = vpop.permute.xlu0 %1035
        %1037 = vrot.lane.b32.xlu0 %v353, 20
        %v1038 = vpop.permute.xlu0 %1037
        %1039 = vrot.lane.b32.xlu0 %v354, 20
        %v1040 = vpop.permute.xlu0 %1039
        %1041 = vrot.lane.b32.xlu0 %v355, 20
        %v1042 = vpop.permute.xlu0 %1041
        %1043 = vrot.lane.b32.xlu0 %v356, 20
        %v1044 = vpop.permute.xlu0 %1043
        %1045 = vrot.lane.b32.xlu0 %v357, 20
        %v1046 = vpop.permute.xlu0 %1045
        %1047 = vrot.lane.b32.xlu0 %v358, 20
        %v1048 = vpop.permute.xlu0 %1047
        %1049 = vrot.lane.b32.xlu0 %v359, 20
        %v1050 = vpop.permute.xlu0 %1049
        %1051 = vrot.lane.b32.xlu0 %v360, 20
        %v1052 = vpop.permute.xlu0 %1051
        %1053 = vrot.lane.b32.xlu0 %v361, 20
        %v1054 = vpop.permute.xlu0 %1053
        %1055 = vrot.lane.b32.xlu0 %v362, 20
        %v1056 = vpop.permute.xlu0 %1055
        %1057 = vrot.lane.b32.xlu0 %v363, 20
        %v1058 = vpop.permute.xlu0 %1057
        %1059 = vrot.lane.b32.xlu0 %v364, 20
        %v1060 = vpop.permute.xlu0 %1059
        %1061 = vrot.lane.b32.xlu0 %v365, 20
        %v1062 = vpop.permute.xlu0 %1061
        %1063 = vrot.lane.b32.xlu0 %v366, 20
        %v1064 = vpop.permute.xlu0 %1063
        %1065 = vrot.lane.b32.xlu0 %v367, 20
        %v1066 = vpop.permute.xlu0 %1065
        %1067 = vrot.lane.b32.xlu0 %v368, 20
        %v1068 = vpop.permute.xlu0 %1067
        %1069 = vrot.lane.b32.xlu0 %v369, 20
        %v1070 = vpop.permute.xlu0 %1069
        %1071 = vrot.lane.b32.xlu0 %v370, 20
        %v1072 = vpop.permute.xlu0 %1071
        %1073 = vrot.lane.b32.xlu0 %v371, 20
        %v1074 = vpop.permute.xlu0 %1073
        %1075 = vrot.lane.b32.xlu0 %v372, 20
        %v1076 = vpop.permute.xlu0 %1075
        %1077 = vrot.lane.b32.xlu0 %v373, 20
        %v1078 = vpop.permute.xlu0 %1077
        %1143 = vrot.lane.b32.xlu0 %v375, 24
        %v1144 = vpop.permute.xlu0 %1143
        %1145 = vrot.lane.b32.xlu0 %v376, 24
        %v1146 = vpop.permute.xlu0 %1145
        %1147 = vrot.lane.b32.xlu0 %v377, 24
        %v1148 = vpop.permute.xlu0 %1147
        %1149 = vrot.lane.b32.xlu0 %v378, 24
        %v1150 = vpop.permute.xlu0 %1149
        %1151 = vrot.lane.b32.xlu0 %v379, 24
        %v1152 = vpop.permute.xlu0 %1151
        %1153 = vrot.lane.b32.xlu0 %v380, 24
        %v1154 = vpop.permute.xlu0 %1153
        %1155 = vrot.lane.b32.xlu0 %v381, 24
        %v1156 = vpop.permute.xlu0 %1155
        %1157 = vrot.lane.b32.xlu0 %v382, 24
        %v1158 = vpop.permute.xlu0 %1157
        %1159 = vrot.lane.b32.xlu0 %v383, 24
        %v1160 = vpop.permute.xlu0 %1159
        %1161 = vrot.lane.b32.xlu0 %v384, 24
        %v1162 = vpop.permute.xlu0 %1161
        %1163 = vrot.lane.b32.xlu0 %v385, 24
        %v1164 = vpop.permute.xlu0 %1163
        %1165 = vrot.lane.b32.xlu0 %v386, 24
        %v1166 = vpop.permute.xlu0 %1165
        %1167 = vrot.lane.b32.xlu0 %v387, 24
        %v1168 = vpop.permute.xlu0 %1167
        %1169 = vrot.lane.b32.xlu0 %v388, 24
        %v1170 = vpop.permute.xlu0 %1169
        %1171 = vrot.lane.b32.xlu0 %v389, 24
        %v1172 = vpop.permute.xlu0 %1171
        %1173 = vrot.lane.b32.xlu0 %v390, 24
        %v1174 = vpop.permute.xlu0 %1173
        %1175 = vrot.lane.b32.xlu0 %v391, 24
        %v1176 = vpop.permute.xlu0 %1175
        %1177 = vrot.lane.b32.xlu0 %v392, 24
        %v1178 = vpop.permute.xlu0 %1177
        %1179 = vrot.lane.b32.xlu0 %v393, 24
        %v1180 = vpop.permute.xlu0 %1179
        %1181 = vrot.lane.b32.xlu0 %v394, 24
        %v1182 = vpop.permute.xlu0 %1181
        %1183 = vrot.lane.b32.xlu0 %v395, 24
        %v1184 = vpop.permute.xlu0 %1183
        %1185 = vrot.lane.b32.xlu0 %v396, 24
        %v1186 = vpop.permute.xlu0 %1185
        %1187 = vrot.lane.b32.xlu0 %v397, 24
        %v1188 = vpop.permute.xlu0 %1187
        %1189 = vrot.lane.b32.xlu0 %v398, 24
        %v1190 = vpop.permute.xlu0 %1189
        %1191 = vrot.lane.b32.xlu0 %v399, 24
        %v1192 = vpop.permute.xlu0 %1191
        %1193 = vrot.lane.b32.xlu0 %v400, 24
        %v1194 = vpop.permute.xlu0 %1193
        %1195 = vrot.lane.b32.xlu0 %v401, 24
        %v1196 = vpop.permute.xlu0 %1195
        %1197 = vrot.lane.b32.xlu0 %v402, 24
        %v1198 = vpop.permute.xlu0 %1197
        %1199 = vrot.lane.b32.xlu0 %v403, 24
        %v1200 = vpop.permute.xlu0 %1199
        %1201 = vrot.lane.b32.xlu0 %v404, 24
        %v1202 = vpop.permute.xlu0 %1201
        %1203 = vrot.lane.b32.xlu0 %v405, 24
        %v1204 = vpop.permute.xlu0 %1203
        %1205 = vrot.lane.b32.xlu0 %v406, 24
        %v1206 = vpop.permute.xlu0 %1205
        %1271 = vrot.lane.b32.xlu0 %v407, 28
        %v1272 = vpop.permute.xlu0 %1271
        %1273 = vrot.lane.b32.xlu0 %v408, 28
        %v1274 = vpop.permute.xlu0 %1273
        %1275 = vrot.lane.b32.xlu0 %v409, 28
        %v1276 = vpop.permute.xlu0 %1275
        %1277 = vrot.lane.b32.xlu0 %v410, 28
        %v1278 = vpop.permute.xlu0 %1277
        %1279 = vrot.lane.b32.xlu0 %v411, 28
        %v1280 = vpop.permute.xlu0 %1279
        %1281 = vrot.lane.b32.xlu0 %v412, 28
        %v1282 = vpop.permute.xlu0 %1281
        %1283 = vrot.lane.b32.xlu0 %v413, 28
        %v1284 = vpop.permute.xlu0 %1283
        %1285 = vrot.lane.b32.xlu0 %v414, 28
        %v1286 = vpop.permute.xlu0 %1285
        %1287 = vrot.lane.b32.xlu0 %v415, 28
        %v1288 = vpop.permute.xlu0 %1287
        %1289 = vrot.lane.b32.xlu0 %v416, 28
        %v1290 = vpop.permute.xlu0 %1289
        %1291 = vrot.lane.b32.xlu0 %v417, 28
        %v1292 = vpop.permute.xlu0 %1291
        %1293 = vrot.lane.b32.xlu0 %v418, 28
        %v1294 = vpop.permute.xlu0 %1293
        %1295 = vrot.lane.b32.xlu0 %v419, 28
        %v1296 = vpop.permute.xlu0 %1295
        %1297 = vrot.lane.b32.xlu0 %v420, 28
        %v1298 = vpop.permute.xlu0 %1297
        %1299 = vrot.lane.b32.xlu0 %v421, 28
        %v1300 = vpop.permute.xlu0 %1299
        %1301 = vrot.lane.b32.xlu0 %v422, 28
        %v1302 = vpop.permute.xlu0 %1301
        %1303 = vrot.lane.b32.xlu0 %v423, 28
        %v1304 = vpop.permute.xlu0 %1303
        %1305 = vrot.lane.b32.xlu0 %v424, 28
        %v1306 = vpop.permute.xlu0 %1305
        %1307 = vrot.lane.b32.xlu0 %v425, 28
        %v1308 = vpop.permute.xlu0 %1307
        %1309 = vrot.lane.b32.xlu0 %v426, 28
        %v1310 = vpop.permute.xlu0 %1309
        %1311 = vrot.lane.b32.xlu0 %v427, 28
        %v1312 = vpop.permute.xlu0 %1311
        %1313 = vrot.lane.b32.xlu0 %v428, 28
        %v1314 = vpop.permute.xlu0 %1313
        %1315 = vrot.lane.b32.xlu0 %v429, 28
        %v1316 = vpop.permute.xlu0 %1315
        %1317 = vrot.lane.b32.xlu0 %v430, 28
        %v1318 = vpop.permute.xlu0 %1317
        %1319 = vrot.lane.b32.xlu0 %v431, 28
        %v1320 = vpop.permute.xlu0 %1319
        %1321 = vrot.lane.b32.xlu0 %v432, 28
        %v1322 = vpop.permute.xlu0 %1321
        %1323 = vrot.lane.b32.xlu0 %v433, 28
        %v1324 = vpop.permute.xlu0 %1323
        %1325 = vrot.lane.b32.xlu0 %v434, 28
        %v1326 = vpop.permute.xlu0 %1325
        %1327 = vrot.lane.b32.xlu0 %v435, 28
        %v1328 = vpop.permute.xlu0 %1327
        %1329 = vrot.lane.b32.xlu0 %v436, 28
        %v1330 = vpop.permute.xlu0 %1329
        %1331 = vrot.lane.b32.xlu0 %v437, 28
        %v1332 = vpop.permute.xlu0 %1331
        %1333 = vrot.lane.b32.xlu0 %v438, 28
        %v1334 = vpop.permute.xlu0 %1333
        %1399 = vrot.lane.b32.xlu0 %v439, 32
        %v1400 = vpop.permute.xlu0 %1399
        %1401 = vrot.lane.b32.xlu0 %v440, 32
        %v1402 = vpop.permute.xlu0 %1401
        %1403 = vrot.lane.b32.xlu0 %v441, 32
        %v1404 = vpop.permute.xlu0 %1403
        %1405 = vrot.lane.b32.xlu0 %v442, 32
        %v1406 = vpop.permute.xlu0 %1405
        %1407 = vrot.lane.b32.xlu0 %v443, 32
        %v1408 = vpop.permute.xlu0 %1407
        %1409 = vrot.lane.b32.xlu0 %v444, 32
        %v1410 = vpop.permute.xlu0 %1409
        %1411 = vrot.lane.b32.xlu0 %v445, 32
        %v1412 = vpop.permute.xlu0 %1411
        %1413 = vrot.lane.b32.xlu0 %v446, 32
        %v1414 = vpop.permute.xlu0 %1413
        %1415 = vrot.lane.b32.xlu0 %v447, 32
        %v1416 = vpop.permute.xlu0 %1415
        %1417 = vrot.lane.b32.xlu0 %v448, 32
        %v1418 = vpop.permute.xlu0 %1417
        %1419 = vrot.lane.b32.xlu0 %v449, 32
        %v1420 = vpop.permute.xlu0 %1419
        %1421 = vrot.lane.b32.xlu0 %v450, 32
        %v1422 = vpop.permute.xlu0 %1421
        %1423 = vrot.lane.b32.xlu0 %v451, 32
        %v1424 = vpop.permute.xlu0 %1423
        %1425 = vrot.lane.b32.xlu0 %v452, 32
        %v1426 = vpop.permute.xlu0 %1425
        %1427 = vrot.lane.b32.xlu0 %v453, 32
        %v1428 = vpop.permute.xlu0 %1427
        %1429 = vrot.lane.b32.xlu0 %v454, 32
        %v1430 = vpop.permute.xlu0 %1429
        %1431 = vrot.lane.b32.xlu0 %v455, 32
        %v1432 = vpop.permute.xlu0 %1431
        %1433 = vrot.lane.b32.xlu0 %v456, 32
        %v1434 = vpop.permute.xlu0 %1433
        %1435 = vrot.lane.b32.xlu0 %v457, 32
        %v1436 = vpop.permute.xlu0 %1435
        %1437 = vrot.lane.b32.xlu0 %v458, 32
        %v1438 = vpop.permute.xlu0 %1437
        %1439 = vrot.lane.b32.xlu0 %v459, 32
        %v1440 = vpop.permute.xlu0 %1439
        %1441 = vrot.lane.b32.xlu0 %v460, 32
        %v1442 = vpop.permute.xlu0 %1441
        %1443 = vrot.lane.b32.xlu0 %v461, 32
        %v1444 = vpop.permute.xlu0 %1443
        %1445 = vrot.lane.b32.xlu0 %v462, 32
        %v1446 = vpop.permute.xlu0 %1445
        %1447 = vrot.lane.b32.xlu0 %v463, 32
        %v1448 = vpop.permute.xlu0 %1447
        %1449 = vrot.lane.b32.xlu0 %v464, 32
        %v1450 = vpop.permute.xlu0 %1449
        %1451 = vrot.lane.b32.xlu0 %v465, 32
        %v1452 = vpop.permute.xlu0 %1451
        %1453 = vrot.lane.b32.xlu0 %v466, 32
        %v1454 = vpop.permute.xlu0 %1453
        %1455 = vrot.lane.b32.xlu0 %v467, 32
        %v1456 = vpop.permute.xlu0 %1455
        %1457 = vrot.lane.b32.xlu0 %v468, 32
        %v1458 = vpop.permute.xlu0 %1457
        %1459 = vrot.lane.b32.xlu0 %v469, 32
        %v1460 = vpop.permute.xlu0 %1459
        %1461 = vrot.lane.b32.xlu0 %v470, 32
        %v1462 = vpop.permute.xlu0 %1461
        %vm1495 = vcmask 31744
        %v1496 = vsel %vm1495, %v181, %v504
        %v1497 = vsel %vm1495, %v182, %v506
        %v1498 = vsel %vm1495, %v183, %v508
        %v1499 = vsel %vm1495, %v184, %v510
        %v1500 = vsel %vm1495, %v185, %v512
        %v1501 = vsel %vm1495, %v186, %v514
        %v1502 = vsel %vm1495, %v187, %v516
        %v1503 = vsel %vm1495, %v188, %v518
        %v1504 = vsel %vm1495, %v189, %v520
        %v1505 = vsel %vm1495, %v190, %v522
        %v1506 = vsel %vm1495, %v191, %v524
        %v1507 = vsel %vm1495, %v192, %v526
        %v1508 = vsel %vm1495, %v193, %v528
        %v1509 = vsel %vm1495, %v194, %v530
        %v1510 = vsel %vm1495, %v195, %v532
        %v1511 = vsel %vm1495, %v196, %v534
        %v1512 = vsel %vm1495, %v197, %v536
        %v1513 = vsel %vm1495, %v198, %v538
        %v1514 = vsel %vm1495, %v199, %v540
        %v1515 = vsel %vm1495, %v200, %v542
        %v1516 = vsel %vm1495, %v201, %v544
        %v1517 = vsel %vm1495, %v202, %v546
        %v1518 = vsel %vm1495, %v203, %v548
        %v1519 = vsel %vm1495, %v204, %v550
        %v1520 = vsel %vm1495, %v205, %v552
        %v1521 = vsel %vm1495, %v206, %v554
        %v1522 = vsel %vm1495, %v207, %v556
        %v1523 = vsel %vm1495, %v208, %v558
        %v1524 = vsel %vm1495, %v209, %v560
        %v1525 = vsel %vm1495, %v210, %v562
        %v1526 = vsel %vm1495, %v211, %v564
        %v1527 = vsel %vm1495, %v212, %v566
        %vm1528 = vcmask 64512
        %v1529 = vsel %vm1528, %v1496, %v632
        %v1530 = vsel %vm1528, %v1497, %v634
        %v1531 = vsel %vm1528, %v1498, %v636
        %v1532 = vsel %vm1528, %v1499, %v638
        %v1533 = vsel %vm1528, %v1500, %v640
        %v1534 = vsel %vm1528, %v1501, %v642
        %v1535 = vsel %vm1528, %v1502, %v644
        %v1536 = vsel %vm1528, %v1503, %v646
        %v1537 = vsel %vm1528, %v1504, %v648
        %v1538 = vsel %vm1528, %v1505, %v650
        %v1539 = vsel %vm1528, %v1506, %v652
        %v1540 = vsel %vm1528, %v1507, %v654
        %v1541 = vsel %vm1528, %v1508, %v656
        %v1542 = vsel %vm1528, %v1509, %v658
        %v1543 = vsel %vm1528, %v1510, %v660
        %v1544 = vsel %vm1528, %v1511, %v662
        %v1545 = vsel %vm1528, %v1512, %v664
        %v1546 = vsel %vm1528, %v1513, %v666
        %v1547 = vsel %vm1528, %v1514, %v668
        %v1548 = vsel %vm1528, %v1515, %v670
        %v1549 = vsel %vm1528, %v1516, %v672
        %v1550 = vsel %vm1528, %v1517, %v674
        %v1551 = vsel %vm1528, %v1518, %v676
        %v1552 = vsel %vm1528, %v1519, %v678
        %v1553 = vsel %vm1528, %v1520, %v680
        %v1554 = vsel %vm1528, %v1521, %v682
        %v1555 = vsel %vm1528, %v1522, %v684
        %v1556 = vsel %vm1528, %v1523, %v686
        %v1557 = vsel %vm1528, %v1524, %v688
        %v1558 = vsel %vm1528, %v1525, %v690
        %v1559 = vsel %vm1528, %v1526, %v692
        %v1560 = vsel %vm1528, %v1527, %v694
        %vm1561 = vcmask 97280
        %v1562 = vsel %vm1561, %v1529, %v760
        %v1563 = vsel %vm1561, %v1530, %v762
        %v1564 = vsel %vm1561, %v1531, %v764
        %v1565 = vsel %vm1561, %v1532, %v766
        %v1566 = vsel %vm1561, %v1533, %v768
        %v1567 = vsel %vm1561, %v1534, %v770
        %v1568 = vsel %vm1561, %v1535, %v772
        %v1569 = vsel %vm1561, %v1536, %v774
        %v1570 = vsel %vm1561, %v1537, %v776
        %v1571 = vsel %vm1561, %v1538, %v778
        %v1572 = vsel %vm1561, %v1539, %v780
        %v1573 = vsel %vm1561, %v1540, %v782
        %v1574 = vsel %vm1561, %v1541, %v784
        %v1575 = vsel %vm1561, %v1542, %v786
        %v1576 = vsel %vm1561, %v1543, %v788
        %v1577 = vsel %vm1561, %v1544, %v790
        %v1578 = vsel %vm1561, %v1545, %v792
        %v1579 = vsel %vm1561, %v1546, %v794
        %v1580 = vsel %vm1561, %v1547, %v796
        %v1581 = vsel %vm1561, %v1548, %v798
        %v1582 = vsel %vm1561, %v1549, %v800
        %v1583 = vsel %vm1561, %v1550, %v802
        %v1584 = vsel %vm1561, %v1551, %v804
        %v1585 = vsel %vm1561, %v1552, %v806
        %v1586 = vsel %vm1561, %v1553, %v808
        %v1587 = vsel %vm1561, %v1554, %v810
        %v1588 = vsel %vm1561, %v1555, %v812
        %v1589 = vsel %vm1561, %v1556, %v814
        %v1590 = vsel %vm1561, %v1557, %v816
        %v1591 = vsel %vm1561, %v1558, %v818
        %v1592 = vsel %vm1561, %v1559, %v820
        %v1593 = vsel %vm1561, %v1560, %v822
        %vm1594 = vcmask 130048
        %v1595 = vsel %vm1594, %v1562, %v888
        %v1596 = vsel %vm1594, %v1563, %v890
        %v1597 = vsel %vm1594, %v1564, %v892
        %v1598 = vsel %vm1594, %v1565, %v894
        %v1599 = vsel %vm1594, %v1566, %v896
        %v1600 = vsel %vm1594, %v1567, %v898
        %v1601 = vsel %vm1594, %v1568, %v900
        %v1602 = vsel %vm1594, %v1569, %v902
        %v1603 = vsel %vm1594, %v1570, %v904
        %v1604 = vsel %vm1594, %v1571, %v906
        %v1605 = vsel %vm1594, %v1572, %v908
        %v1606 = vsel %vm1594, %v1573, %v910
        %v1607 = vsel %vm1594, %v1574, %v912
        %v1608 = vsel %vm1594, %v1575, %v914
        %v1609 = vsel %vm1594, %v1576, %v916
        %v1610 = vsel %vm1594, %v1577, %v918
        %v1611 = vsel %vm1594, %v1578, %v920
        %v1612 = vsel %vm1594, %v1579, %v922
        %v1613 = vsel %vm1594, %v1580, %v924
        %v1614 = vsel %vm1594, %v1581, %v926
        %v1615 = vsel %vm1594, %v1582, %v928
        %v1616 = vsel %vm1594, %v1583, %v930
        %v1617 = vsel %vm1594, %v1584, %v932
        %v1618 = vsel %vm1594, %v1585, %v934
        %v1619 = vsel %vm1594, %v1586, %v936
        %v1620 = vsel %vm1594, %v1587, %v938
        %v1621 = vsel %vm1594, %v1588, %v940
        %v1622 = vsel %vm1594, %v1589, %v942
        %v1623 = vsel %vm1594, %v1590, %v944
        %v1624 = vsel %vm1594, %v1591, %v946
        %v1625 = vsel %vm1594, %v1592, %v948
        %v1626 = vsel %vm1594, %v1593, %v950
        %vm1627 = vcmask 162816
        %v1628 = vsel %vm1627, %v1595, %v1016
        %v1629 = vsel %vm1627, %v1596, %v1018
        %v1630 = vsel %vm1627, %v1597, %v1020
        %v1631 = vsel %vm1627, %v1598, %v1022
        %v1632 = vsel %vm1627, %v1599, %v1024
        %v1633 = vsel %vm1627, %v1600, %v1026
        %v1634 = vsel %vm1627, %v1601, %v1028
        %v1635 = vsel %vm1627, %v1602, %v1030
        %v1636 = vsel %vm1627, %v1603, %v1032
        %v1637 = vsel %vm1627, %v1604, %v1034
        %v1638 = vsel %vm1627, %v1605, %v1036
        %v1639 = vsel %vm1627, %v1606, %v1038
        %v1640 = vsel %vm1627, %v1607, %v1040
        %v1641 = vsel %vm1627, %v1608, %v1042
        %v1642 = vsel %vm1627, %v1609, %v1044
        %v1643 = vsel %vm1627, %v1610, %v1046
        %v1644 = vsel %vm1627, %v1611, %v1048
        %v1645 = vsel %vm1627, %v1612, %v1050
        %v1646 = vsel %vm1627, %v1613, %v1052
        %v1647 = vsel %vm1627, %v1614, %v1054
        %v1648 = vsel %vm1627, %v1615, %v1056
        %v1649 = vsel %vm1627, %v1616, %v1058
        %v1650 = vsel %vm1627, %v1617, %v1060
        %v1651 = vsel %vm1627, %v1618, %v1062
        %v1652 = vsel %vm1627, %v1619, %v1064
        %v1653 = vsel %vm1627, %v1620, %v1066
        %v1654 = vsel %vm1627, %v1621, %v1068
        %v1655 = vsel %vm1627, %v1622, %v1070
        %v1656 = vsel %vm1627, %v1623, %v1072
        %v1657 = vsel %vm1627, %v1624, %v1074
        %v1658 = vsel %vm1627, %v1625, %v1076
        %v1659 = vsel %vm1627, %v1626, %v1078
        %vm1660 = vcmask 195584
        %v1661 = vsel %vm1660, %v1628, %v1144
        %v1662 = vsel %vm1660, %v1629, %v1146
        %v1663 = vsel %vm1660, %v1630, %v1148
        %v1664 = vsel %vm1660, %v1631, %v1150
        %v1665 = vsel %vm1660, %v1632, %v1152
        %v1666 = vsel %vm1660, %v1633, %v1154
        %v1667 = vsel %vm1660, %v1634, %v1156
        %v1668 = vsel %vm1660, %v1635, %v1158
        %v1669 = vsel %vm1660, %v1636, %v1160
        %v1670 = vsel %vm1660, %v1637, %v1162
        %v1671 = vsel %vm1660, %v1638, %v1164
        %v1672 = vsel %vm1660, %v1639, %v1166
        %v1673 = vsel %vm1660, %v1640, %v1168
        %v1674 = vsel %vm1660, %v1641, %v1170
        %v1675 = vsel %vm1660, %v1642, %v1172
        %v1676 = vsel %vm1660, %v1643, %v1174
        %v1677 = vsel %vm1660, %v1644, %v1176
        %v1678 = vsel %vm1660, %v1645, %v1178
        %v1679 = vsel %vm1660, %v1646, %v1180
        %v1680 = vsel %vm1660, %v1647, %v1182
        %v1681 = vsel %vm1660, %v1648, %v1184
        %v1682 = vsel %vm1660, %v1649, %v1186
        %v1683 = vsel %vm1660, %v1650, %v1188
        %v1684 = vsel %vm1660, %v1651, %v1190
        %v1685 = vsel %vm1660, %v1652, %v1192
        %v1686 = vsel %vm1660, %v1653, %v1194
        %v1687 = vsel %vm1660, %v1654, %v1196
        %v1688 = vsel %vm1660, %v1655, %v1198
        %v1689 = vsel %vm1660, %v1656, %v1200
        %v1690 = vsel %vm1660, %v1657, %v1202
        %v1691 = vsel %vm1660, %v1658, %v1204
        %v1692 = vsel %vm1660, %v1659, %v1206
        %vm1693 = vcmask 228352
        %v1694 = vsel %vm1693, %v1661, %v1272
        %v1695 = vsel %vm1693, %v1662, %v1274
        %v1696 = vsel %vm1693, %v1663, %v1276
        %v1697 = vsel %vm1693, %v1664, %v1278
        %v1698 = vsel %vm1693, %v1665, %v1280
        %v1699 = vsel %vm1693, %v1666, %v1282
        %v1700 = vsel %vm1693, %v1667, %v1284
        %v1701 = vsel %vm1693, %v1668, %v1286
        %v1702 = vsel %vm1693, %v1669, %v1288
        %v1703 = vsel %vm1693, %v1670, %v1290
        %v1704 = vsel %vm1693, %v1671, %v1292
        %v1705 = vsel %vm1693, %v1672, %v1294
        %v1706 = vsel %vm1693, %v1673, %v1296
        %v1707 = vsel %vm1693, %v1674, %v1298
        %v1708 = vsel %vm1693, %v1675, %v1300
        %v1709 = vsel %vm1693, %v1676, %v1302
        %v1710 = vsel %vm1693, %v1677, %v1304
        %v1711 = vsel %vm1693, %v1678, %v1306
        %v1712 = vsel %vm1693, %v1679, %v1308
        %v1713 = vsel %vm1693, %v1680, %v1310
        %v1714 = vsel %vm1693, %v1681, %v1312
        %v1715 = vsel %vm1693, %v1682, %v1314
        %v1716 = vsel %vm1693, %v1683, %v1316
        %v1717 = vsel %vm1693, %v1684, %v1318
        %v1718 = vsel %vm1693, %v1685, %v1320
        %v1719 = vsel %vm1693, %v1686, %v1322
        %v1720 = vsel %vm1693, %v1687, %v1324
        %v1721 = vsel %vm1693, %v1688, %v1326
        %v1722 = vsel %vm1693, %v1689, %v1328
        %v1723 = vsel %vm1693, %v1690, %v1330
        %v1724 = vsel %vm1693, %v1691, %v1332
        %v1725 = vsel %vm1693, %v1692, %v1334
        %vm1726 = vcmask 261120
        %v1727 = vsel %vm1726, %v1694, %v1400
        %v1728 = vsel %vm1726, %v1695, %v1402
        %v1729 = vsel %vm1726, %v1696, %v1404
        %v1730 = vsel %vm1726, %v1697, %v1406
        %v1731 = vsel %vm1726, %v1698, %v1408
        %v1732 = vsel %vm1726, %v1699, %v1410
        %v1733 = vsel %vm1726, %v1700, %v1412
        %v1734 = vsel %vm1726, %v1701, %v1414
        %v1735 = vsel %vm1726, %v1702, %v1416
        %v1736 = vsel %vm1726, %v1703, %v1418
        %v1737 = vsel %vm1726, %v1704, %v1420
        %v1738 = vsel %vm1726, %v1705, %v1422
        %v1739 = vsel %vm1726, %v1706, %v1424
        %v1740 = vsel %vm1726, %v1707, %v1426
        %v1741 = vsel %vm1726, %v1708, %v1428
        %v1742 = vsel %vm1726, %v1709, %v1430
        %v1743 = vsel %vm1726, %v1710, %v1432
        %v1744 = vsel %vm1726, %v1711, %v1434
        %v1745 = vsel %vm1726, %v1712, %v1436
        %v1746 = vsel %vm1726, %v1713, %v1438
        %v1747 = vsel %vm1726, %v1714, %v1440
        %v1748 = vsel %vm1726, %v1715, %v1442
        %v1749 = vsel %vm1726, %v1716, %v1444
        %v1750 = vsel %vm1726, %v1717, %v1446
        %v1751 = vsel %vm1726, %v1718, %v1448
        %v1752 = vsel %vm1726, %v1719, %v1450
        %v1753 = vsel %vm1726, %v1720, %v1452
        %v1754 = vsel %vm1726, %v1721, %v1454
        %v1755 = vsel %vm1726, %v1722, %v1456
        %v1756 = vsel %vm1726, %v1723, %v1458
        %v1757 = vsel %vm1726, %v1724, %v1460
        %v1758 = vsel %vm1726, %v1725, %v1462
        %v1759 = vld [vmem:[%s1] sm:$0xff]
        %v1760 = vld [vmem:[%s1 + $0x8] sm:$0xff]
        %v1761 = vld [vmem:[%s1 + $0x10] sm:$0xff]
        %v1762 = vld [vmem:[%s1 + $0x18] sm:$0xff]
        %v1763 = vld [vmem:[%s1 + $0x20] sm:$0xf]
        %vm1764 = vcmask 293888
        %v1766 = vsel %vm1764, %v1727, 0
        %v1769 = vsel %vm1764, %v1728, 0
        %v1772 = vsel %vm1764, %v1729, 0
        %v1775 = vsel %vm1764, %v1730, 0
        %v1778 = vsel %vm1764, %v1731, 0
        %v1781 = vsel %vm1764, %v1732, 0
        %v1784 = vsel %vm1764, %v1733, 0
        %v1787 = vsel %vm1764, %v1734, 0
        %v1790 = vsel %vm1764, %v1735, 0
        %v1793 = vsel %vm1764, %v1736, 0
        %v1796 = vsel %vm1764, %v1737, 0
        %v1799 = vsel %vm1764, %v1738, 0
        %v1802 = vsel %vm1764, %v1739, 0
        %v1805 = vsel %vm1764, %v1740, 0
        %v1808 = vsel %vm1764, %v1741, 0
        %v1811 = vsel %vm1764, %v1742, 0
        %v1814 = vsel %vm1764, %v1743, 0
        %v1817 = vsel %vm1764, %v1744, 0
        %v1820 = vsel %vm1764, %v1745, 0
        %v1823 = vsel %vm1764, %v1746, 0
        %v1826 = vsel %vm1764, %v1747, 0
        %v1829 = vsel %vm1764, %v1748, 0
        %v1832 = vsel %vm1764, %v1749, 0
        %v1835 = vsel %vm1764, %v1750, 0
        %v1838 = vsel %vm1764, %v1751, 0
        %v1841 = vsel %vm1764, %v1752, 0
        %v1844 = vsel %vm1764, %v1753, 0
        %v1847 = vsel %vm1764, %v1754, 0
        %v1850 = vsel %vm1764, %v1755, 0
        %v1853 = vsel %vm1764, %v1756, 0
        %v1856 = vsel %vm1764, %v1757, 0
        %v1859 = vsel %vm1764, %v1758, 0
        %vm1861 = vcmask 1043456
        %v1863 = vsel %vm1861, %v1763, 0
        %1865 = vmatpush.msra.mxu0 0.0
        %1866 = vmatpush.msra.mxu0 0.0
        %1867 = vmatpush.msra.mxu0 0.0
        %1868 = vmatpush.msra.mxu0 0.0
        %1869 = vmatpush.msra.mxu0 0.0
        %1870 = vmatpush.msra.mxu0 0.0
        %1871 = vmatpush.msra.mxu0 0.0
        %1872 = vmatpush.msra.mxu0 0.0
        %1873 = vmatpush.msra.mxu0 0.0
        %1874 = vmatpush.msra.mxu0 0.0
        %1875 = vmatpush.msra.mxu0 0.0
        %1876 = vmatpush.msra.mxu0 %v1863
        %1877 = vmatpush.msra.mxu0 %v1762
        %1878 = vmatpush.msra.mxu0 %v1761
        %1879 = vmatpush.msra.mxu0 %v1760
        %1880 = vmatpush.msra.mxu0 %v1759
        %1881 = vmatmul.f32.gmra.mxu0 %v1766
        %v1882 = vpop.f32.mrf.mxu0
        %v1883 = vadd.f32 0.0, %v1882
        %1884 = vmatmul.f32.gmra.mxu0 %v1769
        %v1885 = vpop.f32.mrf.mxu0
        %v1886 = vadd.f32 0.0, %v1885
        %1887 = vmatmul.f32.gmra.mxu0 %v1772
        %v1888 = vpop.f32.mrf.mxu0
        %v1889 = vadd.f32 0.0, %v1888
        %1890 = vmatmul.f32.gmra.mxu0 %v1775
        %v1891 = vpop.f32.mrf.mxu0
        %v1892 = vadd.f32 0.0, %v1891
        %1893 = vmatmul.f32.gmra.mxu0 %v1778
        %v1894 = vpop.f32.mrf.mxu0
        %v1895 = vadd.f32 0.0, %v1894
        %1896 = vmatmul.f32.gmra.mxu0 %v1781
        %v1897 = vpop.f32.mrf.mxu0
        %v1898 = vadd.f32 0.0, %v1897
        %1899 = vmatmul.f32.gmra.mxu0 %v1784
        %v1900 = vpop.f32.mrf.mxu0
        %v1901 = vadd.f32 0.0, %v1900
        %1902 = vmatmul.f32.gmra.mxu0 %v1787
        %v1903 = vpop.f32.mrf.mxu0
        %v1904 = vadd.f32 0.0, %v1903
        %1905 = vmatmul.f32.gmra.mxu0 %v1790
        %v1906 = vpop.f32.mrf.mxu0
        %v1907 = vadd.f32 0.0, %v1906
        %1908 = vmatmul.f32.gmra.mxu0 %v1793
        %v1909 = vpop.f32.mrf.mxu0
        %v1910 = vadd.f32 0.0, %v1909
        %1911 = vmatmul.f32.gmra.mxu0 %v1796
        %v1912 = vpop.f32.mrf.mxu0
        %v1913 = vadd.f32 0.0, %v1912
        %1914 = vmatmul.f32.gmra.mxu0 %v1799
        %v1915 = vpop.f32.mrf.mxu0
        %v1916 = vadd.f32 0.0, %v1915
        %1917 = vmatmul.f32.gmra.mxu0 %v1802
        %v1918 = vpop.f32.mrf.mxu0
        %v1919 = vadd.f32 0.0, %v1918
        %1920 = vmatmul.f32.gmra.mxu0 %v1805
        %v1921 = vpop.f32.mrf.mxu0
        %v1922 = vadd.f32 0.0, %v1921
        %1923 = vmatmul.f32.gmra.mxu0 %v1808
        %v1924 = vpop.f32.mrf.mxu0
        %v1925 = vadd.f32 0.0, %v1924
        %1926 = vmatmul.f32.gmra.mxu0 %v1811
        %v1927 = vpop.f32.mrf.mxu0
        %v1928 = vadd.f32 0.0, %v1927
        %1929 = vmatmul.f32.gmra.mxu0 %v1814
        %v1930 = vpop.f32.mrf.mxu0
        %v1931 = vadd.f32 0.0, %v1930
        %1932 = vmatmul.f32.gmra.mxu0 %v1817
        %v1933 = vpop.f32.mrf.mxu0
        %v1934 = vadd.f32 0.0, %v1933
        %1935 = vmatmul.f32.gmra.mxu0 %v1820
        %v1936 = vpop.f32.mrf.mxu0
        %v1937 = vadd.f32 0.0, %v1936
        %1938 = vmatmul.f32.gmra.mxu0 %v1823
        %v1939 = vpop.f32.mrf.mxu0
        %v1940 = vadd.f32 0.0, %v1939
        %1941 = vmatmul.f32.gmra.mxu0 %v1826
        %v1942 = vpop.f32.mrf.mxu0
        %v1943 = vadd.f32 0.0, %v1942
        %1944 = vmatmul.f32.gmra.mxu0 %v1829
        %v1945 = vpop.f32.mrf.mxu0
        %v1946 = vadd.f32 0.0, %v1945
        %1947 = vmatmul.f32.gmra.mxu0 %v1832
        %v1948 = vpop.f32.mrf.mxu0
        %v1949 = vadd.f32 0.0, %v1948
        %1950 = vmatmul.f32.gmra.mxu0 %v1835
        %v1951 = vpop.f32.mrf.mxu0
        %v1952 = vadd.f32 0.0, %v1951
        %1953 = vmatmul.f32.gmra.mxu0 %v1838
        %v1954 = vpop.f32.mrf.mxu0
        %v1955 = vadd.f32 0.0, %v1954
        %1956 = vmatmul.f32.gmra.mxu0 %v1841
        %v1957 = vpop.f32.mrf.mxu0
        %v1958 = vadd.f32 0.0, %v1957
        %1959 = vmatmul.f32.gmra.mxu0 %v1844
        %v1960 = vpop.f32.mrf.mxu0
        %v1961 = vadd.f32 0.0, %v1960
        %1962 = vmatmul.f32.gmra.mxu0 %v1847
        %v1963 = vpop.f32.mrf.mxu0
        %v1964 = vadd.f32 0.0, %v1963
        %1965 = vmatmul.f32.gmra.mxu0 %v1850
        %v1966 = vpop.f32.mrf.mxu0
        %v1967 = vadd.f32 0.0, %v1966
        %1968 = vmatmul.f32.gmra.mxu0 %v1853
        %v1969 = vpop.f32.mrf.mxu0
        %v1970 = vadd.f32 0.0, %v1969
        %1971 = vmatmul.f32.gmra.mxu0 %v1856
        %v1972 = vpop.f32.mrf.mxu0
        %v1973 = vadd.f32 0.0, %v1972
        %1974 = vmatmul.f32.gmra.mxu0 %v1859
        %v1975 = vpop.f32.mrf.mxu0
        %v1976 = vadd.f32 0.0, %v1975
        %1977 = vdwg.mxu0
        %1978 = vst [vmem:[%s167] sm:$0xff] %v1883
        %1979 = vst [vmem:[%s167 + $0x8] sm:$0xff] %v1886
        %1980 = vst [vmem:[%s167 + $0x10] sm:$0xff] %v1889
        %1981 = vst [vmem:[%s167 + $0x18] sm:$0xff] %v1892
        %1982 = vst [vmem:[%s167 + $0x20] sm:$0xff] %v1895
        %1983 = vst [vmem:[%s167 + $0x28] sm:$0xff] %v1898
        %1984 = vst [vmem:[%s167 + $0x30] sm:$0xff] %v1901
        %1985 = vst [vmem:[%s167 + $0x38] sm:$0xff] %v1904
        %1986 = vst [vmem:[%s167 + $0x40] sm:$0xff] %v1907
        %1987 = vst [vmem:[%s167 + $0x48] sm:$0xff] %v1910
        %1988 = vst [vmem:[%s167 + $0x50] sm:$0xff] %v1913
        %1989 = vst [vmem:[%s167 + $0x58] sm:$0xff] %v1916
        %1990 = vst [vmem:[%s167 + $0x60] sm:$0xff] %v1919
        %1991 = vst [vmem:[%s167 + $0x68] sm:$0xff] %v1922
        %1992 = vst [vmem:[%s167 + $0x70] sm:$0xff] %v1925
        %1993 = vst [vmem:[%s167 + $0x78] sm:$0xff] %v1928
        %1994 = vst [vmem:[%s167 + $0x80] sm:$0xff] %v1931
        %1995 = vst [vmem:[%s167 + $0x88] sm:$0xff] %v1934
        %1996 = vst [vmem:[%s167 + $0x90] sm:$0xff] %v1937
        %1997 = vst [vmem:[%s167 + $0x98] sm:$0xff] %v1940
        %1998 = vst [vmem:[%s167 + $0xa0] sm:$0xff] %v1943
        %1999 = vst [vmem:[%s167 + $0xa8] sm:$0xff] %v1946
        %2000 = vst [vmem:[%s167 + $0xb0] sm:$0xff] %v1949
        %2001 = vst [vmem:[%s167 + $0xb8] sm:$0xff] %v1952
        %2002 = vst [vmem:[%s167 + $0xc0] sm:$0xff] %v1955
        %2003 = vst [vmem:[%s167 + $0xc8] sm:$0xff] %v1958
        %2004 = vst [vmem:[%s167 + $0xd0] sm:$0xff] %v1961
        %2005 = vst [vmem:[%s167 + $0xd8] sm:$0xff] %v1964
        %2006 = vst [vmem:[%s167 + $0xe0] sm:$0xff] %v1967
        %2007 = vst [vmem:[%s167 + $0xe8] sm:$0xff] %v1970
        %2008 = vst [vmem:[%s167 + $0xf0] sm:$0xff] %v1973
        %2009 = vst [vmem:[%s167 + $0xf8] sm:$0xff] %v1976
        %v2010 = vadd.f32 %v1883, %v1886
        %v2011 = vadd.f32 %v2010, %v1889
        %v2012 = vadd.f32 %v2011, %v1892
        %v2013 = vadd.f32 %v2012, %v1895
        %v2014 = vadd.f32 %v2013, %v1898
        %v2015 = vadd.f32 %v2014, %v1901
        %v2016 = vadd.f32 %v2015, %v1904
        %v2017 = vadd.f32 %v2016, %v1907
        %v2018 = vadd.f32 %v2017, %v1910
        %v2019 = vadd.f32 %v2018, %v1913
        %v2020 = vadd.f32 %v2019, %v1916
        %v2021 = vadd.f32 %v2020, %v1919
        %v2022 = vadd.f32 %v2021, %v1922
        %v2023 = vadd.f32 %v2022, %v1925
        %v2024 = vadd.f32 %v2023, %v1928
        %v2025 = vadd.f32 %v2024, %v1931
        %v2026 = vadd.f32 %v2025, %v1934
        %v2027 = vadd.f32 %v2026, %v1937
        %v2028 = vadd.f32 %v2027, %v1940
        %v2029 = vadd.f32 %v2028, %v1943
        %v2030 = vadd.f32 %v2029, %v1946
        %v2031 = vadd.f32 %v2030, %v1949
        %v2032 = vadd.f32 %v2031, %v1952
        %v2033 = vadd.f32 %v2032, %v1955
        %v2034 = vadd.f32 %v2033, %v1958
        %v2035 = vadd.f32 %v2034, %v1961
        %v2036 = vadd.f32 %v2035, %v1964
        %v2037 = vadd.f32 %v2036, %v1967
        %v2038 = vadd.f32 %v2037, %v1970
        %v2039 = vadd.f32 %v2038, %v1973
        %v2040 = vadd.f32 %v2039, %v1976
        %v2041 = vrot.slane %v2040, 4
        %v2042 = vadd.f32 %v2040, %v2041
        %v2043 = vrot.slane %v2042, 2
        %v2044 = vadd.f32 %v2042, %v2043
        %v2045 = vrot.slane %v2044, 1
        %v2046 = vadd.f32 %v2044, %v2045
        %v2047 = vmul.f32 %v1883, %v1883
        %v2048 = vmul.f32 %v1886, %v1886
        %v2049 = vmul.f32 %v1889, %v1889
        %v2050 = vmul.f32 %v1892, %v1892
        %v2051 = vmul.f32 %v1895, %v1895
        %v2052 = vmul.f32 %v1898, %v1898
        %v2053 = vmul.f32 %v1901, %v1901
        %v2054 = vmul.f32 %v1904, %v1904
        %v2055 = vmul.f32 %v1907, %v1907
        %v2056 = vmul.f32 %v1910, %v1910
        %v2057 = vmul.f32 %v1913, %v1913
        %v2058 = vmul.f32 %v1916, %v1916
        %v2059 = vmul.f32 %v1919, %v1919
        %v2060 = vmul.f32 %v1922, %v1922
        %v2061 = vmul.f32 %v1925, %v1925
        %v2062 = vmul.f32 %v1928, %v1928
        %v2063 = vmul.f32 %v1931, %v1931
        %v2064 = vmul.f32 %v1934, %v1934
        %v2065 = vmul.f32 %v1937, %v1937
        %v2066 = vmul.f32 %v1940, %v1940
        %v2067 = vmul.f32 %v1943, %v1943
        %v2068 = vmul.f32 %v1946, %v1946
        %v2069 = vmul.f32 %v1949, %v1949
        %v2070 = vmul.f32 %v1952, %v1952
        %v2071 = vmul.f32 %v1955, %v1955
        %v2072 = vmul.f32 %v1958, %v1958
        %v2073 = vmul.f32 %v1961, %v1961
        %v2074 = vmul.f32 %v1964, %v1964
        %v2075 = vmul.f32 %v1967, %v1967
        %v2076 = vmul.f32 %v1970, %v1970
        %v2077 = vmul.f32 %v1973, %v1973
        %v2078 = vmul.f32 %v1976, %v1976
        %v2079 = vadd.f32 %v2047, %v2048
        %v2080 = vadd.f32 %v2079, %v2049
        %v2081 = vadd.f32 %v2080, %v2050
        %v2082 = vadd.f32 %v2081, %v2051
        %v2083 = vadd.f32 %v2082, %v2052
        %v2084 = vadd.f32 %v2083, %v2053
        %v2085 = vadd.f32 %v2084, %v2054
        %v2086 = vadd.f32 %v2085, %v2055
        %v2087 = vadd.f32 %v2086, %v2056
        %v2088 = vadd.f32 %v2087, %v2057
        %v2089 = vadd.f32 %v2088, %v2058
        %v2090 = vadd.f32 %v2089, %v2059
        %v2091 = vadd.f32 %v2090, %v2060
        %v2092 = vadd.f32 %v2091, %v2061
        %v2093 = vadd.f32 %v2092, %v2062
        %v2094 = vadd.f32 %v2093, %v2063
        %v2095 = vadd.f32 %v2094, %v2064
        %v2096 = vadd.f32 %v2095, %v2065
        %v2097 = vadd.f32 %v2096, %v2066
        %v2098 = vadd.f32 %v2097, %v2067
        %v2099 = vadd.f32 %v2098, %v2068
        %v2100 = vadd.f32 %v2099, %v2069
        %v2101 = vadd.f32 %v2100, %v2070
        %v2102 = vadd.f32 %v2101, %v2071
        %v2103 = vadd.f32 %v2102, %v2072
        %v2104 = vadd.f32 %v2103, %v2073
        %v2105 = vadd.f32 %v2104, %v2074
        %v2106 = vadd.f32 %v2105, %v2075
        %v2107 = vadd.f32 %v2106, %v2076
        %v2108 = vadd.f32 %v2107, %v2077
        %v2109 = vadd.f32 %v2108, %v2078
        %v2110 = vrot.slane %v2109, 4
        %v2111 = vadd.f32 %v2109, %v2110
        %v2112 = vrot.slane %v2111, 2
        %v2113 = vadd.f32 %v2111, %v2112
        %v2114 = vrot.slane %v2113, 1
        %v2115 = vadd.f32 %v2113, %v2114
        %vm2116 = vcmask 1040384
        %v2117 = vsel %vm2116, %v2046, %v2115
        %2118 = vst [vmem:[%s174] sm:$0x3] %v2117
        %s2119 = sand.u32 %s76, 1
        %s2120 = scalar_lea.sflag [#allocation3], %s2119
        %s2121 = sand.u32 %s76, 1
        %s2122 = smul.addr %s2121, 256
        %s2123 = scalar_lea.vmem [#allocation2], %s2122
        %s2124 = sand.u32 %s102, 1
        %s2125 = scalar_lea.sflag [#allocation5], %s2124
        %s2126 = sand.u32 %s102, 1
        %s2127 = smul.addr %s2126, 2
        %s2128 = scalar_lea.vmem [#allocation4], %s2127
        // Predicated region
        $region29: #{tpu_custom_call.1} parent=27 // pred_check
          %p2129 = pneg %p86
        $region30: #{tpu_custom_call.1} parent=27 // pred_check_branch
          %2131 = sbr.rel (%p2129) target = $region32
        $region31: #{tpu_custom_call.1} parent=27 // pred_region
          %s2132 = smul.u32 32, %s21
          %2134 = vsyncadd %s2120, 0
          %s2135 = smul.addr %s2132, 8
          %s2136 = scalar_lea.hbm %s2, %s2135
          %s2137 = sshll.u32 %s2123, 4
          %s2138 = int_to_ptr.vmem [resolvable:$true] %s2137
          %s2139 = sshll.u32 %s2136, 4
          %s2140 = int_to_ptr.hbm [resolvable:$true] %s2139
          %2145 = dma.vmem_to_hbm [thread:$0]  %s2138, 4096, %s2140, %s2120, 128, 128, 8
        $region32: #{tpu_custom_call.1} parent=27 // pred_fallthru
          _
        // Predicated region
        $region33: #{tpu_custom_call.1} parent=27 // pred_check
          %p2146 = pneg %p112
        $region34: #{tpu_custom_call.1} parent=27 // pred_check_branch
          %2148 = sbr.rel (%p2146) target = $region36
        $region35: #{tpu_custom_call.1} parent=27 // pred_region
          %2150 = vsyncadd %s2125, 0
          %s2151 = smul.addr %s21, 2
          %s2152 = scalar_lea.hbm %s3, %s2151
          %s2154 = sshll.u32 %s2128, 4
          %s2155 = int_to_ptr.vmem [resolvable:$true] %s2154
          %s2156 = sshll.u32 %s2152, 4
          %s2157 = int_to_ptr.hbm [resolvable:$true] %s2156
          %2159 = dma.vmem_to_hbm [thread:$0]  %s2155, 32, %s2157, %s2125
        $region36: #{tpu_custom_call.1} parent=27 // pred_fallthru
          _
      $region28: #{tpu_custom_call.1} parent=5 // pred_fallthru
        _
      %p2160 = scmp.le.s32.totalorder 2, %s16
      // Predicated region
      $region37: #{tpu_custom_call.1} parent=5 // pred_check
        %p2161 = pneg %p2160
      $region38: #{tpu_custom_call.1} parent=5 // pred_check_branch
        %2163 = sbr.rel (%p2161) target = $region40
      $region39: #{tpu_custom_call.1} parent=5 // pred_region
        %s2164 = ssub.s32 %s16, 2
        // Predicated region
        $region41: #{tpu_custom_call.1} parent=39 // pred_check
          %p2165 = pneg %p92
        $region42: #{tpu_custom_call.1} parent=39 // pred_check_branch
          %2167 = sbr.rel (%p2165) target = $region44
        $region43: #{tpu_custom_call.1} parent=39 // pred_region
          %s2168 = sand.u32 %s77, 1
          %s2169 = scalar_lea.sflag [#allocation3], %s2168
          %s2170 = sand.u32 %s77, 1
          %s2171 = smul.addr %s2170, 256
          %s2172 = scalar_lea.vmem [#allocation2], %s2171
          %2174 = dma.done %s2169, 4096
        $region44: #{tpu_custom_call.1} parent=39 // pred_fallthru
          _
        // Predicated region
        $region45: #{tpu_custom_call.1} parent=39 // pred_check
          %p2175 = pneg %p118
        $region46: #{tpu_custom_call.1} parent=39 // pred_check_branch
          %2177 = sbr.rel (%p2175) target = $region48
        $region47: #{tpu_custom_call.1} parent=39 // pred_region
          %s2178 = sand.u32 %s103, 1
          %s2179 = scalar_lea.sflag [#allocation5], %s2178
          %s2180 = sand.u32 %s103, 1
          %s2181 = smul.addr %s2180, 2
          %s2182 = scalar_lea.vmem [#allocation4], %s2181
          %2184 = dma.done %s2179, 32
        $region48: #{tpu_custom_call.1} parent=39 // pred_fallthru
          _
      $region40: #{tpu_custom_call.1} parent=5 // pred_fallthru
        _
    $region6: #{tpu_custom_call.1} parent=1 // loop_footer
      %s20 = sadd.s32 1, %s16
    $region7: #{tpu_custom_call.1} parent=1 // loop_footer_branch
      %15 = sbr.rel target = $region3
    $region8: #{tpu_custom_call.1} parent=1 // loop_exit
      _
    %2185 = vsyncpa [#allocation3], 1
    %s2186 = scalar_lea.sflag [#allocation3], 1
    %2187 = vsyncpa %s2186, 1
    %2188 = vsyncpa [#allocation5], 1
    %s2189 = scalar_lea.sflag [#allocation5], 1
    %2190 = vsyncpa %s2189, 1

</llo_original>
